<compile_context>
chip_gen: v6e
topology: v6e:2x2x1
jax: 0.10.0
libtpu: 0.0.40
codegen_flags: <defaults>
</compile_context>

<pallas_src>
import jax
import jax.numpy as jnp
from jax import lax
from jax.scipy.special import erf
from jax.experimental import pallas as pl
from jax.experimental.pallas import tpu as pltpu

# ---- model hyper-parameters (small, consistent with the module) -------------
H = 128                      # hidden_size
P = 3                        # num_perspectives
NPAIR = P * (P - 1) // 2     # 3 pairwise aggregators
SMOOTH = 0.1                 # attn_smoothing
LN_EPS = 1e-5                # torch.nn.LayerNorm default eps

# row offsets inside the merged f32 parameter slab ([17, 2H])
#   rows 0..13 use lanes [0:H]; rows 14..16 are full 2H-wide
_PWB, _PWG, _PWBE = 0, 3, 6              # pairwise bias / LN gamma / LN beta (3 rows each)
_GB2, _AB1, _AG1, _ABE1, _AB2 = 9, 10, 11, 12, 13
_GB1, _GG1, _GBE1 = 14, 15, 16
# row offsets inside the 128-lane bf16 weight slab ([2H + PH + P, H])
_GW2_OFF, _AW1_OFF, _AW2_OFF = 0, 2 * H, (2 + P) * H

_SQRT_2_OVER_PI = 0.7978845608028654


# ---- math helpers (usable both inside the kernel and in the references) -----
def _gelu(x):
    # tanh-form GELU; tanh goes to the EUP slot (vs a VALU erf polynomial).
    return 0.5 * x * (1.0 + jnp.tanh(_SQRT_2_OVER_PI * (x + 0.044715 * x * x * x)))


def _gelu_exact(x):
    # exact erf GELU (torch.nn.GELU default), used only by the f32 reference.
    return 0.5 * x * (1.0 + erf(x * (1.0 / jnp.sqrt(2.0))))


def _layernorm(x, gamma, beta):
    mu = jnp.mean(x, axis=-1, keepdims=True)
    var = jnp.mean((x - mu) ** 2, axis=-1, keepdims=True)
    return (x - mu) * lax.rsqrt(var + LN_EPS) * gamma + beta


# ---- the Pallas kernel -------------------------------------------------------
def hier_agg_kernel(x_ref, wbig_ref, gw1_ref, w128_ref, fs_ref, out_ref):
    f32 = jnp.float32
    bf16 = jnp.bfloat16

    x = x_ref[...]                                   # [P, H] f32
    x_bf = x.astype(bf16)

    # ---- 1) pairwise aggregators: ONE batched [P,H] x [H,6H] matmul ----------
    # wbig columns: [k*H:(k+1)*H]       = pw_W[k][:H, :]   (multiplies x_i)
    #               [(P+k)*H:(P+k+1)*H] = pw_W[k][H:, :]   (multiplies x_j)
    C = jnp.dot(x_bf, wbig_ref[...], preferred_element_type=f32)      # [P, 6H]

    z0 = C[0:1, 0 * H:1 * H] + C[1:2, 3 * H:4 * H]    # pair (0,1)
    z1 = C[0:1, 1 * H:2 * H] + C[2:3, 4 * H:5 * H]    # pair (0,2)
    z2 = C[1:2, 2 * H:3 * H] + C[2:3, 5 * H:6 * H]    # pair (1,2)
    z = jnp.concatenate([z0, z1, z2], axis=0) + fs_ref[_PWB:_PWB + NPAIR, 0:H]

    # batched LayerNorm + GELU over all three pairwise rows at once
    pair_out = _gelu(_layernorm(z,
                                fs_ref[_PWG:_PWG + NPAIR, 0:H],
                                fs_ref[_PWBE:_PWBE + NPAIR, 0:H]))     # [NPAIR, H]
    pair_bf = pair_out.astype(bf16)

    # ---- 2) global aggregator -------------------------------------------------
    # pairwise_concat @ gW1 == sum_k pair_out[k] @ gW1[k*H:(k+1)*H, :]
    glob = fs_ref[_GB1:_GB1 + 1, :]                                    # gb1 [1, 2H]
    for k in range(NPAIR):
        glob = glob + jnp.dot(pair_bf[k:k + 1, :],
                              gw1_ref[k * H:(k + 1) * H, :],
                              preferred_element_type=f32)
    glob = _gelu(_layernorm(glob, fs_ref[_GG1:_GG1 + 1, :],
                            fs_ref[_GBE1:_GBE1 + 1, :]))
    # Dropout(0.15) is identity in eval mode.
    global_repr = (jnp.dot(glob.astype(bf16),
                           w128_ref[_GW2_OFF:_GW2_OFF + 2 * H, :],
                           preferred_element_type=f32)
                   + fs_ref[_GB2:_GB2 + 1, 0:H])                       # [1, H]

    # ---- 3) attention over the (implicitly flattened) perspectives ------------
    # concat @ aW1 == sum_i x[i] @ aW1[i*H:(i+1)*H, :]  (no separate flat input)
    a = fs_ref[_AB1:_AB1 + 1, 0:H]                                     # ab1 [1, H]
    for i in range(P):
        a = a + jnp.dot(x_bf[i:i + 1, :],
                        w128_ref[_AW1_OFF + i * H:_AW1_OFF + (i + 1) * H, :],
                        preferred_element_type=f32)
    a = _gelu(_layernorm(a, fs_ref[_AG1:_AG1 + 1, 0:H],
                         fs_ref[_ABE1:_ABE1 + 1, 0:H]))
    # aW2 is stored lane-dense as [P, H]; contract the last dims (trans_b).
    logits = lax.dot_general(a.astype(bf16),
                             w128_ref[_AW2_OFF:_AW2_OFF + P, :],
                             dimension_numbers=(((1,), (1,)), ((), ())),
                             preferred_element_type=f32)               # [1, P]
    logits = logits + fs_ref[_AB2:_AB2 + 1, 0:P]

    # softmax + label smoothing (f32, exact divide — trivial cost on [1, P])
    m = jnp.max(logits, axis=-1, keepdims=True)
    e = jnp.exp(logits - m)
    w = e / jnp.sum(e, axis=-1, keepdims=True)
    w = w * (1.0 - SMOOTH) + SMOOTH * (1.0 / P)

    # ---- 4) attention-weighted aggregation: one [1,P] x [P,H] dot ---------------
    wa = jnp.dot(w.astype(bf16), x_bf, preferred_element_type=f32)     # [1, H]

    # ---- single lane-dense [2, H] output --------------------------------------
    out_ref[0:1, :] = (global_repr + wa).astype(out_ref.dtype)
    out_ref[1:2, :] = jnp.zeros((1, H), out_ref.dtype)
    out_ref[1:2, 0:P] = w.astype(out_ref.dtype)


# ---- parameter packing (host side, done once) --------------------------------
def pack_params(raw):
    (pw_W, pw_b, pw_g, pw_be, gW1, gb1, gg1, gbe1, gW2, gb2,
     aW1, ab1, ag1, abe1, aW2, ab2) = raw
    bf16 = jnp.bfloat16
    # pairwise weights rearranged so one [P,H]x[H,6H] matmul covers all pairs
    w_first = jnp.concatenate([pw_W[k, :H, :] for k in range(NPAIR)], axis=1)   # [H, PH]
    w_second = jnp.concatenate([pw_W[k, H:, :] for k in range(NPAIR)], axis=1)  # [H, PH]
    wbig = jnp.concatenate([w_first, w_second], axis=1).astype(bf16)            # [H, 2PH]
    gw1_bf = gW1.astype(bf16)                                                   # [PH, 2H]
    # lane-dense 128-wide bf16 slab: gW2 ; aW1 ; aW2^T
    w128 = jnp.concatenate([gW2, aW1, aW2.T], axis=0).astype(bf16)              # [2H+PH+P, H]
    # merged f32 slab (all biases + LN params), 2H lanes wide
    ab2_row = jnp.zeros((1, H), jnp.float32).at[:, :P].set(ab2)
    small128 = jnp.concatenate([pw_b, pw_g, pw_be, gb2, ab1, ag1, abe1, ab2_row],
                               axis=0)                                          # [14, H]
    pad = jnp.zeros((small128.shape[0], H), jnp.float32)
    fsmall = jnp.concatenate([jnp.concatenate([small128, pad], axis=1),
                              gb1, gg1, gbe1], axis=0)                          # [17, 2H]
    return wbig, gw1_bf, w128, fsmall


# ---- wrapper -----------------------------------------------------------------
def hierarchical_aggregation(stacked, packed):
    wbig, gw1_bf, w128, fsmall = packed
    vmem = pl.BlockSpec(memory_space=pltpu.MemorySpace.VMEM)
    out = pl.pallas_call(
        hier_agg_kernel,
        out_shape=jax.ShapeDtypeStruct((2, H), jnp.float32),
        in_specs=[vmem] * 5,
        out_specs=vmem,
    )(stacked, wbig, gw1_bf, w128, fsmall)
    final_output = out[0:1, :]           # [1, H]
    weights = out[1:2, 0:P]              # [1, P]
    return final_output, weights


# ---- pure-JAX references (mirror the torch forward) ---------------------------
def reference(stacked, raw, *, quantize):
    """quantize=True mirrors the kernel numerics (bf16 matmul inputs, tanh GELU);
    quantize=False is the exact f32 / erf-GELU forward of the torch module."""
    (pw_W, pw_b, pw_g, pw_be, gW1, gb1, gg1, gbe1, gW2, gb2,
     aW1, ab1, ag1, abe1, aW2, ab2) = raw
    q = (lambda t: t.astype(jnp.bfloat16).astype(jnp.float32)) if quantize else (lambda t: t)
    gelu = _gelu if quantize else _gelu_exact
    pairs = [(i, j) for i in range(P) for j in range(i + 1, P)]
    outs = []
    for k, (i, j) in enumerate(pairs):
        pair = jnp.concatenate([stacked[i], stacked[j]])[None, :]
        zz = q(pair) @ q(pw_W[k]) + pw_b[k]
        outs.append(gelu(_layernorm(zz, pw_g[k], pw_be[k])))
    pc = jnp.concatenate(outs, axis=-1)
    h = gelu(_layernorm(q(pc) @ q(gW1) + gb1, gg1, gbe1))          # Dropout = identity (eval)
    global_repr = q(h) @ q(gW2) + gb2
    concat = stacked.reshape(1, -1)
    a = gelu(_layernorm(q(concat) @ q(aW1) + ab1, ag1, abe1))
    logits = q(a) @ q(aW2) + ab2
    w = jax.nn.softmax(logits, axis=-1)
    w = w * (1.0 - SMOOTH) + SMOOTH / P
    # torch: sum(stacked * weights.t().unsqueeze(-1), dim=0) -> [H]
    wa = jnp.sum(q(stacked) * q(w).T, axis=0)
    return global_repr + wa[None, :], w


# ---- parameter construction ----------------------------------------------------
def make_params(key):
    ks = jax.random.split(key, 16)
    nrm = lambda k, shp: (0.02 * jax.random.normal(k, shp)).astype(jnp.float32)
    pw_W = nrm(ks[0], (NPAIR, 2 * H, H))
    pw_b = nrm(ks[1], (NPAIR, H))
    pw_g = jnp.ones((NPAIR, H), jnp.float32) + nrm(ks[2], (NPAIR, H))
    pw_be = nrm(ks[3], (NPAIR, H))
    gW1 = nrm(ks[4], (NPAIR * H, 2 * H))
    gb1 = nrm(ks[5], (1, 2 * H))
    gg1 = jnp.ones((1, 2 * H), jnp.float32) + nrm(ks[6], (1, 2 * H))
    gbe1 = nrm(ks[7], (1, 2 * H))
    gW2 = nrm(ks[8], (2 * H, H))
    gb2 = nrm(ks[9], (1, H))
    aW1 = nrm(ks[10], (P * H, H))
    ab1 = nrm(ks[11], (1, H))
    ag1 = jnp.ones((1, H), jnp.float32) + nrm(ks[12], (1, H))
    abe1 = nrm(ks[13], (1, H))
    aW2 = nrm(ks[14], (H, P))
    ab2 = nrm(ks[15], (1, P))
    return (pw_W, pw_b, pw_g, pw_be, gW1, gb1, gg1, gbe1, gW2, gb2,
            aW1, ab1, ag1, abe1, aW2, ab2)


if __name__ == "__main__":
    key = jax.random.PRNGKey(0)
    kx, kp = jax.random.split(key)
    # encoded_responses: P vectors of shape [H], stacked -> [P, H]
    stacked = jax.random.normal(kx, (P, H), dtype=jnp.float32)
    raw = make_params(kp)
    packed = pack_params(raw)

    fwd = jax.jit(hierarchical_aggregation)
    final_out, weights = fwd(stacked, packed)
    jax.block_until_ready((final_out, weights))

    assert final_out.shape == (1, H) and weights.shape == (1, P)

    # implementation check: reference with the same bf16-rounded matmul inputs
    ref_final_q, ref_w_q = reference(stacked, raw, quantize=True)
    assert jnp.allclose(final_out, ref_final_q, atol=5e-3, rtol=2e-3)
    assert jnp.allclose(weights, ref_w_q, atol=2e-3, rtol=2e-3)

    # semantic check: exact f32 / erf-GELU forward of the original module
    ref_final, ref_w = reference(stacked, raw, quantize=False)
    assert jnp.allclose(final_out, ref_final, atol=2e-2, rtol=2e-2)
    assert jnp.allclose(weights, ref_w, atol=5e-3, rtol=5e-3)

    print("KERNEL_OK")
</pallas_src>

<mosaic_0001>
module attributes {stable_mosaic.version = 11 : i64} {
  func.func @hier_agg_kernel(%arg0: memref<3x128xf32, #tpu.memory_space<vmem>>, %arg1: memref<128x768xbf16, #tpu.memory_space<vmem>>, %arg2: memref<384x256xbf16, #tpu.memory_space<vmem>>, %arg3: memref<643x128xbf16, #tpu.memory_space<vmem>>, %arg4: memref<17x256xf32, #tpu.memory_space<vmem>>, %arg5: memref<2x128xf32, #tpu.memory_space<vmem>>) attributes {dimension_semantics = [], scalar_prefetch = 0 : i64, scratch_operands = 0 : i64, tpu.core_type = #tpu.core_type<tc>} {
    %c0 = arith.constant 0 : index
    %c0_0 = arith.constant 0 : index
    %0 = vector.load %arg0[%c0, %c0_0] : memref<3x128xf32, #tpu.memory_space<vmem>>, vector<3x128xf32>
    %1 = arith.truncf %0 : vector<3x128xf32> to vector<3x128xbf16>
    %c0_1 = arith.constant 0 : index
    %c0_2 = arith.constant 0 : index
    %2 = vector.load %arg1[%c0_1, %c0_2] : memref<128x768xbf16, #tpu.memory_space<vmem>>, vector<128x768xbf16>
    %cst = arith.constant dense<0.000000e+00> : vector<3x768xf32>
    %3 = tpu.matmul %1, %2, %cst {dimension_numbers = #tpu.dot_dimension_numbers<[1], [0], [0], [1], [0, 0, 1, 1], [], []>} : vector<3x128xbf16>, vector<128x768xbf16>, vector<3x768xf32> -> vector<3x768xf32>
    %4 = vector.extract_strided_slice %3 {offsets = [0, 0], sizes = [1, 128], strides = [1, 1]} : vector<3x768xf32> to vector<1x128xf32>
    %5 = vector.extract_strided_slice %3 {offsets = [1, 384], sizes = [1, 128], strides = [1, 1]} : vector<3x768xf32> to vector<1x128xf32>
    %6 = arith.addf %4, %5 : vector<1x128xf32>
    %7 = vector.extract_strided_slice %3 {offsets = [0, 128], sizes = [1, 128], strides = [1, 1]} : vector<3x768xf32> to vector<1x128xf32>
    %8 = vector.extract_strided_slice %3 {offsets = [2, 512], sizes = [1, 128], strides = [1, 1]} : vector<3x768xf32> to vector<1x128xf32>
    %9 = arith.addf %7, %8 : vector<1x128xf32>
    %10 = vector.extract_strided_slice %3 {offsets = [1, 256], sizes = [1, 128], strides = [1, 1]} : vector<3x768xf32> to vector<1x128xf32>
    %11 = vector.extract_strided_slice %3 {offsets = [2, 640], sizes = [1, 128], strides = [1, 1]} : vector<3x768xf32> to vector<1x128xf32>
    %12 = arith.addf %10, %11 : vector<1x128xf32>
    %13 = tpu.concatenate %6, %9, %12 in 0 : vector<1x128xf32>, vector<1x128xf32>, vector<1x128xf32> -> vector<3x128xf32>
    %c0_3 = arith.constant 0 : index
    %c0_4 = arith.constant 0 : index
    %14 = vector.load %arg4[%c0_3, %c0_4] : memref<17x256xf32, #tpu.memory_space<vmem>>, vector<3x128xf32>
    %15 = arith.addf %13, %14 : vector<3x128xf32>
    %c3 = arith.constant 3 : index
    %c0_5 = arith.constant 0 : index
    %16 = vector.load %arg4[%c3, %c0_5] : memref<17x256xf32, #tpu.memory_space<vmem>>, vector<3x128xf32>
    %c6 = arith.constant 6 : index
    %c0_6 = arith.constant 0 : index
    %17 = vector.load %arg4[%c6, %c0_6] : memref<17x256xf32, #tpu.memory_space<vmem>>, vector<3x128xf32>
    %cst_7 = arith.constant dense<0.000000e+00> : vector<3xf32>
    %18 = vector.multi_reduction <add>, %15, %cst_7 [1] : vector<3x128xf32> to vector<3xf32>
    %19 = vector.shape_cast %18 : vector<3xf32> to vector<3x1xf32>
    %cst_8 = arith.constant 1.280000e+02 : f32
    %20 = vector.broadcast %cst_8 : f32 to vector<3x1xf32>
    %21 = arith.divf %19, %20 : vector<3x1xf32>
    %22 = vector.broadcast %21 : vector<3x1xf32> to vector<3x128xf32>
    %23 = arith.subf %15, %22 : vector<3x128xf32>
    %24 = arith.mulf %23, %23 : vector<3x128xf32>
    %cst_9 = arith.constant dense<0.000000e+00> : vector<3xf32>
    %25 = vector.multi_reduction <add>, %24, %cst_9 [1] : vector<3x128xf32> to vector<3xf32>
    %26 = vector.shape_cast %25 : vector<3xf32> to vector<3x1xf32>
    %cst_10 = arith.constant 1.280000e+02 : f32
    %27 = vector.broadcast %cst_10 : f32 to vector<3x1xf32>
    %28 = arith.divf %26, %27 : vector<3x1xf32>
    %29 = vector.broadcast %21 : vector<3x1xf32> to vector<3x128xf32>
    %30 = arith.subf %15, %29 : vector<3x128xf32>
    %cst_11 = arith.constant 9.99999974E-6 : f32
    %31 = vector.broadcast %cst_11 : f32 to vector<3x1xf32>
    %32 = arith.addf %28, %31 : vector<3x1xf32>
    %33 = math.rsqrt %32 : vector<3x1xf32>
    %34 = vector.broadcast %33 : vector<3x1xf32> to vector<3x128xf32>
    %35 = arith.mulf %30, %34 : vector<3x128xf32>
    %36 = arith.mulf %35, %16 : vector<3x128xf32>
    %37 = arith.addf %36, %17 : vector<3x128xf32>
    %cst_12 = arith.constant 5.000000e-01 : f32
    %38 = vector.broadcast %cst_12 : f32 to vector<3x128xf32>
    %39 = arith.mulf %38, %37 : vector<3x128xf32>
    %cst_13 = arith.constant 4.471500e-02 : f32
    %40 = vector.broadcast %cst_13 : f32 to vector<3x128xf32>
    %41 = arith.mulf %40, %37 : vector<3x128xf32>
    %42 = arith.mulf %41, %37 : vector<3x128xf32>
    %43 = arith.mulf %42, %37 : vector<3x128xf32>
    %44 = arith.addf %37, %43 : vector<3x128xf32>
    %cst_14 = arith.constant 0.797884583 : f32
    %45 = vector.broadcast %cst_14 : f32 to vector<3x128xf32>
    %46 = arith.mulf %45, %44 : vector<3x128xf32>
    %47 = math.tanh %46 : vector<3x128xf32>
    %cst_15 = arith.constant 1.000000e+00 : f32
    %48 = vector.broadcast %cst_15 : f32 to vector<3x128xf32>
    %49 = arith.addf %48, %47 : vector<3x128xf32>
    %50 = arith.mulf %39, %49 : vector<3x128xf32>
    %51 = arith.truncf %50 : vector<3x128xf32> to vector<3x128xbf16>
    %c14 = arith.constant 14 : index
    %c0_16 = arith.constant 0 : index
    %52 = vector.load %arg4[%c14, %c0_16] : memref<17x256xf32, #tpu.memory_space<vmem>>, vector<1x256xf32>
    %53 = vector.extract_strided_slice %51 {offsets = [0, 0], sizes = [1, 128], strides = [1, 1]} : vector<3x128xbf16> to vector<1x128xbf16>
    %c0_17 = arith.constant 0 : index
    %c0_18 = arith.constant 0 : index
    %54 = vector.load %arg2[%c0_17, %c0_18] : memref<384x256xbf16, #tpu.memory_space<vmem>>, vector<128x256xbf16>
    %cst_19 = arith.constant dense<0.000000e+00> : vector<1x256xf32>
    %55 = tpu.matmul %53, %54, %cst_19 {dimension_numbers = #tpu.dot_dimension_numbers<[1], [0], [0], [1], [0, 0, 1, 1], [], []>} : vector<1x128xbf16>, vector<128x256xbf16>, vector<1x256xf32> -> vector<1x256xf32>
    %56 = arith.addf %52, %55 : vector<1x256xf32>
    %57 = vector.extract_strided_slice %51 {offsets = [1, 0], sizes = [1, 128], strides = [1, 1]} : vector<3x128xbf16> to vector<1x128xbf16>
    %c128 = arith.constant 128 : index
    %c0_20 = arith.constant 0 : index
    %58 = vector.load %arg2[%c128, %c0_20] : memref<384x256xbf16, #tpu.memory_space<vmem>>, vector<128x256xbf16>
    %cst_21 = arith.constant dense<0.000000e+00> : vector<1x256xf32>
    %59 = tpu.matmul %57, %58, %cst_21 {dimension_numbers = #tpu.dot_dimension_numbers<[1], [0], [0], [1], [0, 0, 1, 1], [], []>} : vector<1x128xbf16>, vector<128x256xbf16>, vector<1x256xf32> -> vector<1x256xf32>
    %60 = arith.addf %56, %59 : vector<1x256xf32>
    %61 = vector.extract_strided_slice %51 {offsets = [2, 0], sizes = [1, 128], strides = [1, 1]} : vector<3x128xbf16> to vector<1x128xbf16>
    %c256 = arith.constant 256 : index
    %c0_22 = arith.constant 0 : index
    %62 = vector.load %arg2[%c256, %c0_22] : memref<384x256xbf16, #tpu.memory_space<vmem>>, vector<128x256xbf16>
    %cst_23 = arith.constant dense<0.000000e+00> : vector<1x256xf32>
    %63 = tpu.matmul %61, %62, %cst_23 {dimension_numbers = #tpu.dot_dimension_numbers<[1], [0], [0], [1], [0, 0, 1, 1], [], []>} : vector<1x128xbf16>, vector<128x256xbf16>, vector<1x256xf32> -> vector<1x256xf32>
    %64 = arith.addf %60, %63 : vector<1x256xf32>
    %c15 = arith.constant 15 : index
    %c0_24 = arith.constant 0 : index
    %65 = vector.load %arg4[%c15, %c0_24] : memref<17x256xf32, #tpu.memory_space<vmem>>, vector<1x256xf32>
    %c16 = arith.constant 16 : index
    %c0_25 = arith.constant 0 : index
    %66 = vector.load %arg4[%c16, %c0_25] : memref<17x256xf32, #tpu.memory_space<vmem>>, vector<1x256xf32>
    %cst_26 = arith.constant dense<0.000000e+00> : vector<1xf32>
    %67 = vector.multi_reduction <add>, %64, %cst_26 [1] : vector<1x256xf32> to vector<1xf32>
    %68 = vector.shape_cast %67 : vector<1xf32> to vector<1x1xf32>
    %cst_27 = arith.constant 2.560000e+02 : f32
    %69 = vector.broadcast %cst_27 : f32 to vector<1x1xf32>
    %70 = arith.divf %68, %69 : vector<1x1xf32>
    %71 = vector.broadcast %70 : vector<1x1xf32> to vector<1x256xf32>
    %72 = arith.subf %64, %71 : vector<1x256xf32>
    %73 = arith.mulf %72, %72 : vector<1x256xf32>
    %cst_28 = arith.constant dense<0.000000e+00> : vector<1xf32>
    %74 = vector.multi_reduction <add>, %73, %cst_28 [1] : vector<1x256xf32> to vector<1xf32>
    %75 = vector.shape_cast %74 : vector<1xf32> to vector<1x1xf32>
    %cst_29 = arith.constant 2.560000e+02 : f32
    %76 = vector.broadcast %cst_29 : f32 to vector<1x1xf32>
    %77 = arith.divf %75, %76 : vector<1x1xf32>
    %78 = vector.broadcast %70 : vector<1x1xf32> to vector<1x256xf32>
    %79 = arith.subf %64, %78 : vector<1x256xf32>
    %cst_30 = arith.constant 9.99999974E-6 : f32
    %80 = vector.broadcast %cst_30 : f32 to vector<1x1xf32>
    %81 = arith.addf %77, %80 : vector<1x1xf32>
    %82 = math.rsqrt %81 : vector<1x1xf32>
    %83 = vector.broadcast %82 : vector<1x1xf32> to vector<1x256xf32>
    %84 = arith.mulf %79, %83 : vector<1x256xf32>
    %85 = arith.mulf %84, %65 : vector<1x256xf32>
    %86 = arith.addf %85, %66 : vector<1x256xf32>
    %cst_31 = arith.constant 5.000000e-01 : f32
    %87 = vector.broadcast %cst_31 : f32 to vector<1x256xf32>
    %88 = arith.mulf %87, %86 : vector<1x256xf32>
    %cst_32 = arith.constant 4.471500e-02 : f32
    %89 = vector.broadcast %cst_32 : f32 to vector<1x256xf32>
    %90 = arith.mulf %89, %86 : vector<1x256xf32>
    %91 = arith.mulf %90, %86 : vector<1x256xf32>
    %92 = arith.mulf %91, %86 : vector<1x256xf32>
    %93 = arith.addf %86, %92 : vector<1x256xf32>
    %cst_33 = arith.constant 0.797884583 : f32
    %94 = vector.broadcast %cst_33 : f32 to vector<1x256xf32>
    %95 = arith.mulf %94, %93 : vector<1x256xf32>
    %96 = math.tanh %95 : vector<1x256xf32>
    %cst_34 = arith.constant 1.000000e+00 : f32
    %97 = vector.broadcast %cst_34 : f32 to vector<1x256xf32>
    %98 = arith.addf %97, %96 : vector<1x256xf32>
    %99 = arith.mulf %88, %98 : vector<1x256xf32>
    %100 = arith.truncf %99 : vector<1x256xf32> to vector<1x256xbf16>
    %c0_35 = arith.constant 0 : index
    %c0_36 = arith.constant 0 : index
    %101 = vector.load %arg3[%c0_35, %c0_36] : memref<643x128xbf16, #tpu.memory_space<vmem>>, vector<256x128xbf16>
    %cst_37 = arith.constant dense<0.000000e+00> : vector<1x128xf32>
    %102 = tpu.matmul %100, %101, %cst_37 {dimension_numbers = #tpu.dot_dimension_numbers<[1], [0], [0], [1], [0, 0, 1, 1], [], []>} : vector<1x256xbf16>, vector<256x128xbf16>, vector<1x128xf32> -> vector<1x128xf32>
    %c9 = arith.constant 9 : index
    %c0_38 = arith.constant 0 : index
    %103 = vector.load %arg4[%c9, %c0_38] : memref<17x256xf32, #tpu.memory_space<vmem>>, vector<1x128xf32>
    %104 = arith.addf %102, %103 : vector<1x128xf32>
    %c10 = arith.constant 10 : index
    %c0_39 = arith.constant 0 : index
    %105 = vector.load %arg4[%c10, %c0_39] : memref<17x256xf32, #tpu.memory_space<vmem>>, vector<1x128xf32>
    %106 = vector.extract_strided_slice %1 {offsets = [0, 0], sizes = [1, 128], strides = [1, 1]} : vector<3x128xbf16> to vector<1x128xbf16>
    %c256_40 = arith.constant 256 : index
    %c0_41 = arith.constant 0 : index
    %107 = vector.load %arg3[%c256_40, %c0_41] : memref<643x128xbf16, #tpu.memory_space<vmem>>, vector<128x128xbf16>
    %cst_42 = arith.constant dense<0.000000e+00> : vector<1x128xf32>
    %108 = tpu.matmul %106, %107, %cst_42 {dimension_numbers = #tpu.dot_dimension_numbers<[1], [0], [0], [1], [0, 0, 1, 1], [], []>} : vector<1x128xbf16>, vector<128x128xbf16>, vector<1x128xf32> -> vector<1x128xf32>
    %109 = arith.addf %105, %108 : vector<1x128xf32>
    %110 = vector.extract_strided_slice %1 {offsets = [1, 0], sizes = [1, 128], strides = [1, 1]} : vector<3x128xbf16> to vector<1x128xbf16>
    %c384 = arith.constant 384 : index
    %c0_43 = arith.constant 0 : index
    %111 = vector.load %arg3[%c384, %c0_43] : memref<643x128xbf16, #tpu.memory_space<vmem>>, vector<128x128xbf16>
    %cst_44 = arith.constant dense<0.000000e+00> : vector<1x128xf32>
    %112 = tpu.matmul %110, %111, %cst_44 {dimension_numbers = #tpu.dot_dimension_numbers<[1], [0], [0], [1], [0, 0, 1, 1], [], []>} : vector<1x128xbf16>, vector<128x128xbf16>, vector<1x128xf32> -> vector<1x128xf32>
    %113 = arith.addf %109, %112 : vector<1x128xf32>
    %114 = vector.extract_strided_slice %1 {offsets = [2, 0], sizes = [1, 128], strides = [1, 1]} : vector<3x128xbf16> to vector<1x128xbf16>
    %c512 = arith.constant 512 : index
    %c0_45 = arith.constant 0 : index
    %115 = vector.load %arg3[%c512, %c0_45] : memref<643x128xbf16, #tpu.memory_space<vmem>>, vector<128x128xbf16>
    %cst_46 = arith.constant dense<0.000000e+00> : vector<1x128xf32>
    %116 = tpu.matmul %114, %115, %cst_46 {dimension_numbers = #tpu.dot_dimension_numbers<[1], [0], [0], [1], [0, 0, 1, 1], [], []>} : vector<1x128xbf16>, vector<128x128xbf16>, vector<1x128xf32> -> vector<1x128xf32>
    %117 = arith.addf %113, %116 : vector<1x128xf32>
    %c11 = arith.constant 11 : index
    %c0_47 = arith.constant 0 : index
    %118 = vector.load %arg4[%c11, %c0_47] : memref<17x256xf32, #tpu.memory_space<vmem>>, vector<1x128xf32>
    %c12 = arith.constant 12 : index
    %c0_48 = arith.constant 0 : index
    %119 = vector.load %arg4[%c12, %c0_48] : memref<17x256xf32, #tpu.memory_space<vmem>>, vector<1x128xf32>
    %cst_49 = arith.constant dense<0.000000e+00> : vector<1xf32>
    %120 = vector.multi_reduction <add>, %117, %cst_49 [1] : vector<1x128xf32> to vector<1xf32>
    %121 = vector.shape_cast %120 : vector<1xf32> to vector<1x1xf32>
    %cst_50 = arith.constant 1.280000e+02 : f32
    %122 = vector.broadcast %cst_50 : f32 to vector<1x1xf32>
    %123 = arith.divf %121, %122 : vector<1x1xf32>
    %124 = vector.broadcast %123 : vector<1x1xf32> to vector<1x128xf32>
    %125 = arith.subf %117, %124 : vector<1x128xf32>
    %126 = arith.mulf %125, %125 : vector<1x128xf32>
    %cst_51 = arith.constant dense<0.000000e+00> : vector<1xf32>
    %127 = vector.multi_reduction <add>, %126, %cst_51 [1] : vector<1x128xf32> to vector<1xf32>
    %128 = vector.shape_cast %127 : vector<1xf32> to vector<1x1xf32>
    %cst_52 = arith.constant 1.280000e+02 : f32
    %129 = vector.broadcast %cst_52 : f32 to vector<1x1xf32>
    %130 = arith.divf %128, %129 : vector<1x1xf32>
    %131 = vector.broadcast %123 : vector<1x1xf32> to vector<1x128xf32>
    %132 = arith.subf %117, %131 : vector<1x128xf32>
    %cst_53 = arith.constant 9.99999974E-6 : f32
    %133 = vector.broadcast %cst_53 : f32 to vector<1x1xf32>
    %134 = arith.addf %130, %133 : vector<1x1xf32>
    %135 = math.rsqrt %134 : vector<1x1xf32>
    %136 = vector.broadcast %135 : vector<1x1xf32> to vector<1x128xf32>
    %137 = arith.mulf %132, %136 : vector<1x128xf32>
    %138 = arith.mulf %137, %118 : vector<1x128xf32>
    %139 = arith.addf %138, %119 : vector<1x128xf32>
    %cst_54 = arith.constant 5.000000e-01 : f32
    %140 = vector.broadcast %cst_54 : f32 to vector<1x128xf32>
    %141 = arith.mulf %140, %139 : vector<1x128xf32>
    %cst_55 = arith.constant 4.471500e-02 : f32
    %142 = vector.broadcast %cst_55 : f32 to vector<1x128xf32>
    %143 = arith.mulf %142, %139 : vector<1x128xf32>
    %144 = arith.mulf %143, %139 : vector<1x128xf32>
    %145 = arith.mulf %144, %139 : vector<1x128xf32>
    %146 = arith.addf %139, %145 : vector<1x128xf32>
    %cst_56 = arith.constant 0.797884583 : f32
    %147 = vector.broadcast %cst_56 : f32 to vector<1x128xf32>
    %148 = arith.mulf %147, %146 : vector<1x128xf32>
    %149 = math.tanh %148 : vector<1x128xf32>
    %cst_57 = arith.constant 1.000000e+00 : f32
    %150 = vector.broadcast %cst_57 : f32 to vector<1x128xf32>
    %151 = arith.addf %150, %149 : vector<1x128xf32>
    %152 = arith.mulf %141, %151 : vector<1x128xf32>
    %153 = arith.truncf %152 : vector<1x128xf32> to vector<1x128xbf16>
    %c640 = arith.constant 640 : index
    %c0_58 = arith.constant 0 : index
    %154 = vector.load %arg3[%c640, %c0_58] : memref<643x128xbf16, #tpu.memory_space<vmem>>, vector<3x128xbf16>
    %cst_59 = arith.constant dense<0.000000e+00> : vector<1x3xf32>
    %155 = tpu.matmul %153, %154, %cst_59 {dimension_numbers = #tpu.dot_dimension_numbers<[1], [1], [0], [0], [0, 0, 1, 0], [], []>} : vector<1x128xbf16>, vector<3x128xbf16>, vector<1x3xf32> -> vector<1x3xf32>
    %c13 = arith.constant 13 : index
    %c0_60 = arith.constant 0 : index
    %156 = vector.load %arg4[%c13, %c0_60] : memref<17x256xf32, #tpu.memory_space<vmem>>, vector<1x3xf32>
    %157 = arith.addf %155, %156 : vector<1x3xf32>
    %cst_61 = arith.constant dense<0xFF800000> : vector<1xf32>
    %158 = vector.multi_reduction <maximumf>, %157, %cst_61 [1] : vector<1x3xf32> to vector<1xf32>
    %159 = vector.shape_cast %158 : vector<1xf32> to vector<1x1xf32>
    %160 = vector.broadcast %159 : vector<1x1xf32> to vector<1x3xf32>
    %161 = arith.subf %157, %160 : vector<1x3xf32>
    %162 = math.exp %161 : vector<1x3xf32>
    %cst_62 = arith.constant dense<0.000000e+00> : vector<1xf32>
    %163 = vector.multi_reduction <add>, %162, %cst_62 [1] : vector<1x3xf32> to vector<1xf32>
    %164 = vector.shape_cast %163 : vector<1xf32> to vector<1x1xf32>
    %165 = vector.broadcast %164 : vector<1x1xf32> to vector<1x3xf32>
    %166 = arith.divf %162, %165 : vector<1x3xf32>
    %cst_63 = arith.constant 0.899999976 : f32
    %167 = vector.broadcast %cst_63 : f32 to vector<1x3xf32>
    %168 = arith.mulf %166, %167 : vector<1x3xf32>
    %cst_64 = arith.constant 0.0333333351 : f32
    %169 = vector.broadcast %cst_64 : f32 to vector<1x3xf32>
    %170 = arith.addf %168, %169 : vector<1x3xf32>
    %171 = arith.truncf %170 : vector<1x3xf32> to vector<1x3xbf16>
    %cst_65 = arith.constant dense<0.000000e+00> : vector<1x128xf32>
    %172 = tpu.matmul %171, %1, %cst_65 {dimension_numbers = #tpu.dot_dimension_numbers<[1], [0], [0], [1], [0, 0, 1, 1], [], []>} : vector<1x3xbf16>, vector<3x128xbf16>, vector<1x128xf32> -> vector<1x128xf32>
    %173 = arith.addf %104, %172 : vector<1x128xf32>
    %c0_66 = arith.constant 0 : index
    %c0_67 = arith.constant 0 : index
    %174 = vector.load %arg5[%c0_66, %c0_67] : memref<2x128xf32, #tpu.memory_space<vmem>>, vector<1x128xf32>
    tpu.vector_store %arg5[%c0_66, %c0_67], %173 {strides = array<i32>} : memref<2x128xf32, #tpu.memory_space<vmem>>, vector<1x128xf32>,
    %cst_68 = arith.constant 0.000000e+00 : f32
    %175 = vector.broadcast %cst_68 : f32 to vector<1x128xf32>
    %c1 = arith.constant 1 : index
    %c0_69 = arith.constant 0 : index
    %176 = vector.load %arg5[%c1, %c0_69] : memref<2x128xf32, #tpu.memory_space<vmem>>, vector<1x128xf32>
    tpu.vector_store %arg5[%c1, %c0_69], %175 {strides = array<i32>} : memref<2x128xf32, #tpu.memory_space<vmem>>, vector<1x128xf32>,
    %c1_70 = arith.constant 1 : index
    %c0_71 = arith.constant 0 : index
    %177 = vector.load %arg5[%c1_70, %c0_71] : memref<2x128xf32, #tpu.memory_space<vmem>>, vector<1x3xf32>
    tpu.vector_store %arg5[%c1_70, %c0_71], %170 {strides = array<i32>} : memref<2x128xf32, #tpu.memory_space<vmem>>, vector<1x3xf32>,
    return
  }
}

</mosaic_0001>

<llo_original>
// kernel: hierarchical_aggregation.1
$region0: #{hierarchical_aggregation.1}
  #allocation0 [shape = 'u32[]', space=smem, size = 0x4, offset = 0x4, fixed_abs, tag = 'smem constant byte address 0x4 - core index']
  #allocation1 [shape = 'u32[144,128]{1,0:T(1,128)}', space=vmem, size = 0x12000, scoped, tag = 'internal scratch']
  %s0 = inlined_call_operand.hbm [shape: f32[3,128], index: 0, kind: input, shape index: {}]
  %s1 = inlined_call_operand.hbm [shape: bf16[128,768], index: 1, kind: input, shape index: {}]
  %s2 = inlined_call_operand.hbm [shape: bf16[384,256], index: 2, kind: input, shape index: {}]
  %s3 = inlined_call_operand.hbm [shape: bf16[643,128], index: 3, kind: input, shape index: {}]
  %s4 = inlined_call_operand.hbm [shape: f32[17,256], index: 4, kind: input, shape index: {}]
  %s5 = inlined_call_operand.vmem [shape: f32[2,128], index: 5, kind: output, shape index: {}]
  %s6 = sld [smem:[#allocation0]]
  $region50: #{hierarchical_aggregation.1} parent=0
    _
  %s8 = ssub.s32 1, %s6
  %s9 = scalar_select 0, %s8, %s6
  $region1: #{hierarchical_aggregation.1} parent=0
    #allocation2 [shape = 'u8[2048]{0}', space=vmem, size = 0x800, scoped, tag = 'input window, operand 0, single buffered']
    #allocation3 [shape = 's32[1]{0}', space=sflag, size = 0x4, scoped, tag = 'scoped memory for hierarchical_aggregation.1']
    #allocation4 [shape = 'u8[196608]{0}', space=vmem, size = 0x30000, scoped, tag = 'input window, operand 1, single buffered']
    #allocation5 [shape = 's32[1]{0}', space=sflag, size = 0x4, scoped, tag = 'scoped memory for hierarchical_aggregation.1']
    #allocation6 [shape = 'u8[196608]{0}', space=vmem, size = 0x30000, scoped, tag = 'input window, operand 2, single buffered']
    #allocation7 [shape = 'u8[165888]{0}', space=vmem, size = 0x28800, scoped, tag = 'input window, operand 3, single buffered']
    #allocation8 [shape = 's32[1]{0}', space=sflag, size = 0x4, scoped, tag = 'scoped memory for hierarchical_aggregation.1']
    #allocation9 [shape = 'u8[24576]{0}', space=vmem, size = 0x6000, scoped, tag = 'input window, operand 4, single buffered']
    %10 = vsyncpa [#allocation3], 0
    %11 = vsyncpa [#allocation5], 0
    %12 = vsyncpa [#allocation8], 0
    // Predicated region
    $region2: #{hierarchical_aggregation.1} parent=1 // pred_check
      _
    $region3: #{hierarchical_aggregation.1} parent=1 // pred_check_branch
      %14 = sbr.rel (0) target = $region5
    $region4: #{hierarchical_aggregation.1} parent=1 // pred_region
      %s16 = ssub.s32 64, 64
      %17 = vsyncadd [#allocation3], %s16
      %s19 = sshll.u32 [#allocation2], 4
      %s20 = int_to_ptr.vmem [resolvable:$true] %s19
      %22 = dma.hbm_to_vmem [thread:$0]  %s0, 64, %s20, [#allocation3]
    $region5: #{hierarchical_aggregation.1} parent=1 // pred_fallthru
      _
    // Predicated region
    $region6: #{hierarchical_aggregation.1} parent=1 // pred_check
      _
    $region7: #{hierarchical_aggregation.1} parent=1 // pred_check_branch
      %24 = sbr.rel (0) target = $region9
    $region8: #{hierarchical_aggregation.1} parent=1 // pred_region
      %s26 = ssub.s32 6144, 6144
      %27 = vsyncadd [#allocation5], %s26
      %s28 = sshll.u32 [#allocation4], 4
      %s29 = int_to_ptr.vmem [resolvable:$true] %s28
      %34 = dma.hbm_to_vmem [thread:$0]  %s1, 6144, %s29, [#allocation5], 384, 384, 24
    $region9: #{hierarchical_aggregation.1} parent=1 // pred_fallthru
      _
    // Predicated region
    $region10: #{hierarchical_aggregation.1} parent=1 // pred_check
      _
    $region11: #{hierarchical_aggregation.1} parent=1 // pred_check_branch
      %36 = sbr.rel (0) target = $region13
    $region12: #{hierarchical_aggregation.1} parent=1 // pred_region
      %s38 = ssub.s32 6144, 6144
      %39 = vsyncadd [#allocation5], %s38
      %s40 = sshll.u32 [#allocation6], 4
      %s41 = int_to_ptr.vmem [resolvable:$true] %s40
      %46 = dma.hbm_to_vmem [thread:$0]  %s2, 6144, %s41, [#allocation5], 128, 128, 8
    $region13: #{hierarchical_aggregation.1} parent=1 // pred_fallthru
      _
    // Predicated region
    $region14: #{hierarchical_aggregation.1} parent=1 // pred_check
      _
    $region15: #{hierarchical_aggregation.1} parent=1 // pred_check_branch
      %48 = sbr.rel (0) target = $region17
    $region16: #{hierarchical_aggregation.1} parent=1 // pred_region
      %s50 = ssub.s32 5184, 5184
      %51 = vsyncadd [#allocation8], %s50
      %s52 = sshll.u32 [#allocation7], 4
      %s53 = int_to_ptr.vmem [resolvable:$true] %s52
      %58 = dma.hbm_to_vmem [thread:$0]  %s3, 5184, %s53, [#allocation8], 64, 64, 4
    $region17: #{hierarchical_aggregation.1} parent=1 // pred_fallthru
      _
    // Predicated region
    $region18: #{hierarchical_aggregation.1} parent=1 // pred_check
      _
    $region19: #{hierarchical_aggregation.1} parent=1 // pred_check_branch
      %60 = sbr.rel (0) target = $region21
    $region20: #{hierarchical_aggregation.1} parent=1 // pred_region
      %s62 = ssub.s32 768, 768
      %63 = vsyncadd [#allocation8], %s62
      %s64 = sshll.u32 [#allocation9], 4
      %s65 = int_to_ptr.vmem [resolvable:$true] %s64
      %70 = dma.hbm_to_vmem [thread:$0]  %s4, 768, %s65, [#allocation8], 256, 256, 16
    $region21: #{hierarchical_aggregation.1} parent=1 // pred_fallthru
      _
    // Predicated region
    $region22: #{hierarchical_aggregation.1} parent=1 // pred_check
      _
    $region23: #{hierarchical_aggregation.1} parent=1 // pred_check_branch
      %72 = sbr.rel (0) target = $region25
    $region24: #{hierarchical_aggregation.1} parent=1 // pred_region
      %73 = dma.done [#allocation3], 64
    $region25: #{hierarchical_aggregation.1} parent=1 // pred_fallthru
      _
    // Predicated region
    $region26: #{hierarchical_aggregation.1} parent=1 // pred_check
      _
    $region27: #{hierarchical_aggregation.1} parent=1 // pred_check_branch
      %75 = sbr.rel (0) target = $region29
    $region28: #{hierarchical_aggregation.1} parent=1 // pred_region
      %76 = dma.done [#allocation5], 6144
    $region29: #{hierarchical_aggregation.1} parent=1 // pred_fallthru
      _
    // Predicated region
    $region30: #{hierarchical_aggregation.1} parent=1 // pred_check
      _
    $region31: #{hierarchical_aggregation.1} parent=1 // pred_check_branch
      %78 = sbr.rel (0) target = $region33
    $region32: #{hierarchical_aggregation.1} parent=1 // pred_region
      %79 = dma.done [#allocation5], 6144
    $region33: #{hierarchical_aggregation.1} parent=1 // pred_fallthru
      _
    // Predicated region
    $region34: #{hierarchical_aggregation.1} parent=1 // pred_check
      _
    $region35: #{hierarchical_aggregation.1} parent=1 // pred_check_branch
      %81 = sbr.rel (0) target = $region37
    $region36: #{hierarchical_aggregation.1} parent=1 // pred_region
      %82 = dma.done [#allocation8], 5184
    $region37: #{hierarchical_aggregation.1} parent=1 // pred_fallthru
      _
    // Predicated region
    $region38: #{hierarchical_aggregation.1} parent=1 // pred_check
      _
    $region39: #{hierarchical_aggregation.1} parent=1 // pred_check_branch
      %84 = sbr.rel (0) target = $region41
    $region40: #{hierarchical_aggregation.1} parent=1 // pred_region
      %85 = dma.done [#allocation8], 768
    $region41: #{hierarchical_aggregation.1} parent=1 // pred_fallthru
      _
    %v87 = vld [vmem:[#allocation2] sm:$0x7]
    %v88 = vpack.c.bf16 %v87, %v87
    %v89 = vld [vmem:[#allocation4] sm:$0xff]
    %v90 = vld [vmem:[#allocation4 + $0x8] sm:$0xff]
    %v91 = vld [vmem:[#allocation4 + $0x10] sm:$0xff]
    %v92 = vld [vmem:[#allocation4 + $0x18] sm:$0xff]
    %v93 = vld [vmem:[#allocation4 + $0x20] sm:$0xff]
    %v94 = vld [vmem:[#allocation4 + $0x28] sm:$0xff]
    %v95 = vld [vmem:[#allocation4 + $0x30] sm:$0xff]
    %v96 = vld [vmem:[#allocation4 + $0x38] sm:$0xff]
    %v97 = vld [vmem:[#allocation4 + $0x40] sm:$0xff]
    %v98 = vld [vmem:[#allocation4 + $0x48] sm:$0xff]
    %v99 = vld [vmem:[#allocation4 + $0x50] sm:$0xff]
    %v100 = vld [vmem:[#allocation4 + $0x58] sm:$0xff]
    %v101 = vld [vmem:[#allocation4 + $0x60] sm:$0xff]
    %v102 = vld [vmem:[#allocation4 + $0x68] sm:$0xff]
    %v103 = vld [vmem:[#allocation4 + $0x70] sm:$0xff]
    %v104 = vld [vmem:[#allocation4 + $0x78] sm:$0xff]
    %v105 = vld [vmem:[#allocation4 + $0x80] sm:$0xff]
    %v106 = vld [vmem:[#allocation4 + $0x88] sm:$0xff]
    %v107 = vld [vmem:[#allocation4 + $0x90] sm:$0xff]
    %v108 = vld [vmem:[#allocation4 + $0x98] sm:$0xff]
    %v109 = vld [vmem:[#allocation4 + $0xa0] sm:$0xff]
    %v110 = vld [vmem:[#allocation4 + $0xa8] sm:$0xff]
    %v111 = vld [vmem:[#allocation4 + $0xb0] sm:$0xff]
    %v112 = vld [vmem:[#allocation4 + $0xb8] sm:$0xff]
    %v113 = vld [vmem:[#allocation4 + $0xc0] sm:$0xff]
    %v114 = vld [vmem:[#allocation4 + $0xc8] sm:$0xff]
    %v115 = vld [vmem:[#allocation4 + $0xd0] sm:$0xff]
    %v116 = vld [vmem:[#allocation4 + $0xd8] sm:$0xff]
    %v117 = vld [vmem:[#allocation4 + $0xe0] sm:$0xff]
    %v118 = vld [vmem:[#allocation4 + $0xe8] sm:$0xff]
    %v119 = vld [vmem:[#allocation4 + $0xf0] sm:$0xff]
    %v120 = vld [vmem:[#allocation4 + $0xf8] sm:$0xff]
    %v121 = vld [vmem:[#allocation4 + $0x100] sm:$0xff]
    %v122 = vld [vmem:[#allocation4 + $0x108] sm:$0xff]
    %v123 = vld [vmem:[#allocation4 + $0x110] sm:$0xff]
    %v124 = vld [vmem:[#allocation4 + $0x118] sm:$0xff]
    %v125 = vld [vmem:[#allocation4 + $0x120] sm:$0xff]
    %v126 = vld [vmem:[#allocation4 + $0x128] sm:$0xff]
    %v127 = vld [vmem:[#allocation4 + $0x130] sm:$0xff]
    %v128 = vld [vmem:[#allocation4 + $0x138] sm:$0xff]
    %v129 = vld [vmem:[#allocation4 + $0x140] sm:$0xff]
    %v130 = vld [vmem:[#allocation4 + $0x148] sm:$0xff]
    %v131 = vld [vmem:[#allocation4 + $0x150] sm:$0xff]
    %v132 = vld [vmem:[#allocation4 + $0x158] sm:$0xff]
    %v133 = vld [vmem:[#allocation4 + $0x160] sm:$0xff]
    %v134 = vld [vmem:[#allocation4 + $0x168] sm:$0xff]
    %v135 = vld [vmem:[#allocation4 + $0x170] sm:$0xff]
    %v136 = vld [vmem:[#allocation4 + $0x178] sm:$0xff]
    %v185 = vunpack.c.l.b16 %v89
    %v186 = vunpack.c.h.b16 %v89
    %v187 = vunpack.c.l.b16 %v90
    %v188 = vunpack.c.h.b16 %v90
    %v189 = vunpack.c.l.b16 %v91
    %v190 = vunpack.c.h.b16 %v91
    %v191 = vunpack.c.l.b16 %v92
    %v192 = vunpack.c.h.b16 %v92
    %v193 = vunpack.c.l.b16 %v93
    %v194 = vunpack.c.h.b16 %v93
    %v195 = vunpack.c.l.b16 %v94
    %v196 = vunpack.c.h.b16 %v94
    %v197 = vunpack.c.l.b16 %v95
    %v198 = vunpack.c.h.b16 %v95
    %v199 = vunpack.c.l.b16 %v96
    %v200 = vunpack.c.h.b16 %v96
    %v201 = vunpack.c.l.b16 %v97
    %v202 = vunpack.c.h.b16 %v97
    %v203 = vunpack.c.l.b16 %v98
    %v204 = vunpack.c.h.b16 %v98
    %v205 = vunpack.c.l.b16 %v99
    %v206 = vunpack.c.h.b16 %v99
    %v207 = vunpack.c.l.b16 %v100
    %v208 = vunpack.c.h.b16 %v100
    %v209 = vunpack.c.l.b16 %v101
    %v210 = vunpack.c.h.b16 %v101
    %v211 = vunpack.c.l.b16 %v102
    %v212 = vunpack.c.h.b16 %v102
    %v213 = vunpack.c.l.b16 %v103
    %v214 = vunpack.c.h.b16 %v103
    %v215 = vunpack.c.l.b16 %v104
    %v216 = vunpack.c.h.b16 %v104
    %v217 = vunpack.c.l.b16 %v105
    %v218 = vunpack.c.h.b16 %v105
    %v219 = vunpack.c.l.b16 %v106
    %v220 = vunpack.c.h.b16 %v106
    %v221 = vunpack.c.l.b16 %v107
    %v222 = vunpack.c.h.b16 %v107
    %v223 = vunpack.c.l.b16 %v108
    %v224 = vunpack.c.h.b16 %v108
    %v225 = vunpack.c.l.b16 %v109
    %v226 = vunpack.c.h.b16 %v109
    %v227 = vunpack.c.l.b16 %v110
    %v228 = vunpack.c.h.b16 %v110
    %v229 = vunpack.c.l.b16 %v111
    %v230 = vunpack.c.h.b16 %v111
    %v231 = vunpack.c.l.b16 %v112
    %v232 = vunpack.c.h.b16 %v112
    %v233 = vunpack.c.l.b16 %v113
    %v234 = vunpack.c.h.b16 %v113
    %v235 = vunpack.c.l.b16 %v114
    %v236 = vunpack.c.h.b16 %v114
    %v237 = vunpack.c.l.b16 %v115
    %v238 = vunpack.c.h.b16 %v115
    %v239 = vunpack.c.l.b16 %v116
    %v240 = vunpack.c.h.b16 %v116
    %v241 = vunpack.c.l.b16 %v117
    %v242 = vunpack.c.h.b16 %v117
    %v243 = vunpack.c.l.b16 %v118
    %v244 = vunpack.c.h.b16 %v118
    %v245 = vunpack.c.l.b16 %v119
    %v246 = vunpack.c.h.b16 %v119
    %v247 = vunpack.c.l.b16 %v120
    %v248 = vunpack.c.h.b16 %v120
    %v249 = vunpack.c.l.b16 %v121
    %v250 = vunpack.c.h.b16 %v121
    %v251 = vunpack.c.l.b16 %v122
    %v252 = vunpack.c.h.b16 %v122
    %v253 = vunpack.c.l.b16 %v123
    %v254 = vunpack.c.h.b16 %v123
    %v255 = vunpack.c.l.b16 %v124
    %v256 = vunpack.c.h.b16 %v124
    %v257 = vunpack.c.l.b16 %v125
    %v258 = vunpack.c.h.b16 %v125
    %v259 = vunpack.c.l.b16 %v126
    %v260 = vunpack.c.h.b16 %v126
    %v261 = vunpack.c.l.b16 %v127
    %v262 = vunpack.c.h.b16 %v127
    %v263 = vunpack.c.l.b16 %v128
    %v264 = vunpack.c.h.b16 %v128
    %v265 = vunpack.c.l.b16 %v129
    %v266 = vunpack.c.h.b16 %v129
    %v267 = vunpack.c.l.b16 %v130
    %v268 = vunpack.c.h.b16 %v130
    %v269 = vunpack.c.l.b16 %v131
    %v270 = vunpack.c.h.b16 %v131
    %v271 = vunpack.c.l.b16 %v132
    %v272 = vunpack.c.h.b16 %v132
    %v273 = vunpack.c.l.b16 %v133
    %v274 = vunpack.c.h.b16 %v133
    %v275 = vunpack.c.l.b16 %v134
    %v276 = vunpack.c.h.b16 %v134
    %v277 = vunpack.c.l.b16 %v135
    %v278 = vunpack.c.h.b16 %v135
    %v279 = vunpack.c.l.b16 %v136
    %v280 = vunpack.c.h.b16 %v136
    %v281 = vpack.c.b16 %v191, %v185
    %v282 = vpack.c.b16 %v192, %v186
    %v283 = vpack.c.b16 %v193, %v187
    %v284 = vpack.c.b16 %v194, %v188
    %v285 = vpack.c.b16 %v195, %v189
    %v286 = vpack.c.b16 %v196, %v190
    %v287 = vpack.c.b16 %v203, %v197
    %v288 = vpack.c.b16 %v204, %v198
    %v289 = vpack.c.b16 %v205, %v199
    %v290 = vpack.c.b16 %v206, %v200
    %v291 = vpack.c.b16 %v207, %v201
    %v292 = vpack.c.b16 %v208, %v202
    %v293 = vpack.c.b16 %v215, %v209
    %v294 = vpack.c.b16 %v216, %v210
    %v295 = vpack.c.b16 %v217, %v211
    %v296 = vpack.c.b16 %v218, %v212
    %v297 = vpack.c.b16 %v219, %v213
    %v298 = vpack.c.b16 %v220, %v214
    %v299 = vpack.c.b16 %v227, %v221
    %v300 = vpack.c.b16 %v228, %v222
    %v301 = vpack.c.b16 %v229, %v223
    %v302 = vpack.c.b16 %v230, %v224
    %v303 = vpack.c.b16 %v231, %v225
    %v304 = vpack.c.b16 %v232, %v226
    %v305 = vpack.c.b16 %v239, %v233
    %v306 = vpack.c.b16 %v240, %v234
    %v307 = vpack.c.b16 %v241, %v235
    %v308 = vpack.c.b16 %v242, %v236
    %v309 = vpack.c.b16 %v243, %v237
    %v310 = vpack.c.b16 %v244, %v238
    %v311 = vpack.c.b16 %v251, %v245
    %v312 = vpack.c.b16 %v252, %v246
    %v313 = vpack.c.b16 %v253, %v247
    %v314 = vpack.c.b16 %v254, %v248
    %v315 = vpack.c.b16 %v255, %v249
    %v316 = vpack.c.b16 %v256, %v250
    %v317 = vpack.c.b16 %v263, %v257
    %v318 = vpack.c.b16 %v264, %v258
    %v319 = vpack.c.b16 %v265, %v259
    %v320 = vpack.c.b16 %v266, %v260
    %v321 = vpack.c.b16 %v267, %v261
    %v322 = vpack.c.b16 %v268, %v262
    %v323 = vpack.c.b16 %v275, %v269
    %v324 = vpack.c.b16 %v276, %v270
    %v325 = vpack.c.b16 %v277, %v271
    %v326 = vpack.c.b16 %v278, %v272
    %v327 = vpack.c.b16 %v279, %v273
    %v328 = vpack.c.b16 %v280, %v274
    %377 = vmatprep.subr.bf16.mxu0 %v324
    %378 = vmatpush1.bf16.msra.mxu0 %v323
    %379 = vmatprep.subr.bf16.mxu0 %v318
    %380 = vmatpush1.bf16.msra.mxu0 %v317
    %381 = vmatprep.subr.bf16.mxu0 %v312
    %382 = vmatpush1.bf16.msra.mxu0 %v311
    %383 = vmatprep.subr.bf16.mxu0 %v306
    %384 = vmatpush1.bf16.msra.mxu0 %v305
    %385 = vmatprep.subr.bf16.mxu0 %v300
    %386 = vmatpush1.bf16.msra.mxu0 %v299
    %387 = vmatprep.subr.bf16.mxu0 %v294
    %388 = vmatpush1.bf16.msra.mxu0 %v293
    %389 = vmatprep.subr.bf16.mxu0 %v288
    %390 = vmatpush1.bf16.msra.mxu0 %v287
    %391 = vmatprep.subr.bf16.mxu0 %v282
    %392 = vmatpush1.bf16.msra.mxu0 %v281
    %393 = vmatprep.subr.bf16.mxu0 0
    %394 = vmatpush2.bf16.msra.mxu0 0
    %395 = vmatprep.subr.bf16.mxu0 0
    %396 = vmatpush2.bf16.msra.mxu0 0
    %397 = vmatprep.subr.bf16.mxu0 0
    %398 = vmatpush2.bf16.msra.mxu0 0
    %399 = vmatprep.subr.bf16.mxu0 0
    %400 = vmatpush2.bf16.msra.mxu0 0
    %401 = vmatprep.subr.bf16.mxu0 0
    %402 = vmatpush2.bf16.msra.mxu0 0
    %403 = vmatprep.subr.bf16.mxu0 0
    %404 = vmatpush2.bf16.msra.mxu0 0
    %405 = vmatprep.subr.bf16.mxu0 0
    %406 = vmatpush2.bf16.msra.mxu0 0
    %407 = vmatprep.subr.bf16.mxu0 0
    %408 = vmatpush2.bf16.msra.mxu0 0
    %409 = vmatprep.mubr.bf16.mxu0 0
    %410 = vmatmul.mubr.bf16.gmra.mxu0 %v88
    %v411 = vpop.f32.mrf.mxu0
    %v412 = vadd.f32 0.0, %v411
    %v413 = vpop.f32.mrf.mxu0
    %v414 = vadd.f32 0.0, %v413
    %v415 = vpop.f32.mrf.mxu0
    %v416 = vpop.f32.mrf.mxu0
    %417 = vdwg.mxu0
    %418 = vmatprep.subr.bf16.mxu0 %v326
    %419 = vmatpush1.bf16.msra.mxu0 %v325
    %420 = vmatprep.subr.bf16.mxu0 %v320
    %421 = vmatpush1.bf16.msra.mxu0 %v319
    %422 = vmatprep.subr.bf16.mxu0 %v314
    %423 = vmatpush1.bf16.msra.mxu0 %v313
    %424 = vmatprep.subr.bf16.mxu0 %v308
    %425 = vmatpush1.bf16.msra.mxu0 %v307
    %426 = vmatprep.subr.bf16.mxu0 %v302
    %427 = vmatpush1.bf16.msra.mxu0 %v301
    %428 = vmatprep.subr.bf16.mxu0 %v296
    %429 = vmatpush1.bf16.msra.mxu0 %v295
    %430 = vmatprep.subr.bf16.mxu0 %v290
    %431 = vmatpush1.bf16.msra.mxu0 %v289
    %432 = vmatprep.subr.bf16.mxu0 %v284
    %433 = vmatpush1.bf16.msra.mxu0 %v283
    %434 = vmatprep.subr.bf16.mxu0 0
    %435 = vmatpush2.bf16.msra.mxu0 0
    %436 = vmatprep.subr.bf16.mxu0 0
    %437 = vmatpush2.bf16.msra.mxu0 0
    %438 = vmatprep.subr.bf16.mxu0 0
    %439 = vmatpush2.bf16.msra.mxu0 0
    %440 = vmatprep.subr.bf16.mxu0 0
    %441 = vmatpush2.bf16.msra.mxu0 0
    %442 = vmatprep.subr.bf16.mxu0 0
    %443 = vmatpush2.bf16.msra.mxu0 0
    %444 = vmatprep.subr.bf16.mxu0 0
    %445 = vmatpush2.bf16.msra.mxu0 0
    %446 = vmatprep.subr.bf16.mxu0 0
    %447 = vmatpush2.bf16.msra.mxu0 0
    %448 = vmatprep.subr.bf16.mxu0 0
    %449 = vmatpush2.bf16.msra.mxu0 0
    %450 = vmatprep.mubr.bf16.mxu0 0
    %451 = vmatmul.mubr.bf16.gmra.mxu0 %v88
    %v452 = vpop.f32.mrf.mxu0
    %v453 = vadd.f32 0.0, %v452
    %v454 = vpop.f32.mrf.mxu0
    %v455 = vadd.f32 0.0, %v454
    %v456 = vpop.f32.mrf.mxu0
    %v457 = vpop.f32.mrf.mxu0
    %458 = vdwg.mxu0
    %459 = vmatprep.subr.bf16.mxu0 %v328
    %460 = vmatpush1.bf16.msra.mxu0 %v327
    %461 = vmatprep.subr.bf16.mxu0 %v322
    %462 = vmatpush1.bf16.msra.mxu0 %v321
    %463 = vmatprep.subr.bf16.mxu0 %v316
    %464 = vmatpush1.bf16.msra.mxu0 %v315
    %465 = vmatprep.subr.bf16.mxu0 %v310
    %466 = vmatpush1.bf16.msra.mxu0 %v309
    %467 = vmatprep.subr.bf16.mxu0 %v304
    %468 = vmatpush1.bf16.msra.mxu0 %v303
    %469 = vmatprep.subr.bf16.mxu0 %v298
    %470 = vmatpush1.bf16.msra.mxu0 %v297
    %471 = vmatprep.subr.bf16.mxu0 %v292
    %472 = vmatpush1.bf16.msra.mxu0 %v291
    %473 = vmatprep.subr.bf16.mxu0 %v286
    %474 = vmatpush1.bf16.msra.mxu0 %v285
    %475 = vmatprep.subr.bf16.mxu0 0
    %476 = vmatpush2.bf16.msra.mxu0 0
    %477 = vmatprep.subr.bf16.mxu0 0
    %478 = vmatpush2.bf16.msra.mxu0 0
    %479 = vmatprep.subr.bf16.mxu0 0
    %480 = vmatpush2.bf16.msra.mxu0 0
    %481 = vmatprep.subr.bf16.mxu0 0
    %482 = vmatpush2.bf16.msra.mxu0 0
    %483 = vmatprep.subr.bf16.mxu0 0
    %484 = vmatpush2.bf16.msra.mxu0 0
    %485 = vmatprep.subr.bf16.mxu0 0
    %486 = vmatpush2.bf16.msra.mxu0 0
    %487 = vmatprep.subr.bf16.mxu0 0
    %488 = vmatpush2.bf16.msra.mxu0 0
    %489 = vmatprep.subr.bf16.mxu0 0
    %490 = vmatpush2.bf16.msra.mxu0 0
    %491 = vmatprep.mubr.bf16.mxu0 0
    %492 = vmatmul.mubr.bf16.gmra.mxu0 %v88
    %v493 = vpop.f32.mrf.mxu0
    %v494 = vadd.f32 0.0, %v493
    %v495 = vpop.f32.mrf.mxu0
    %v496 = vadd.f32 0.0, %v495
    %v497 = vpop.f32.mrf.mxu0
    %v498 = vpop.f32.mrf.mxu0
    %499 = vdwg.mxu0
    %v501 = vrot.slane %v455, 1
    %v503 = vadd.f32 %v412, %v501
    %v505 = vrot.slane %v494, 2
    %v507 = vadd.f32 %v414, %v505
    %v509 = vrot.slane %v496, 1
    %v511 = vadd.f32 %v453, %v509
    %v513 = vrot.slane %v507, 7
    %v516 = vrot.slane %v511, 7
    %vm518 = vcmask 1040384
    %v519 = vsel %vm518, %v503, %v513
    %vm520 = vcmask 1041408
    %v521 = vsel %vm520, %v519, %v516
    %v522 = vld [vmem:[#allocation9] sm:$0x7]
    %v523 = vadd.f32 %v521, %v522
    %v524 = vld [vmem:[#allocation9] sm:$0x38]
    %v525 = vld [vmem:[#allocation9] sm:$0xc0]
    %v526 = vld [vmem:[#allocation9 + $0x10] sm:$0x1]
    %vm527 = vcmask 1042432
    %v528 = vsel %vm527, %v523, 0.0
    %529 = vadd.xlane.f32.xlu0 %v528
    %v530 = vpop.xlane.xlu0 %529
    %v531 = vrcp.pop 128.0
    %v532 = vmul.f32 %v530, %v531
    %v533 = vsub.f32 %v523, %v532
    %v534 = vmul.f32 %v533, %v533
    %v535 = vsel %vm527, %v534, 0.0
    %536 = vadd.xlane.f32.xlu0 %v535
    %v537 = vpop.xlane.xlu0 %536
    %v538 = vmul.f32 %v537, %v531
    %v539 = vadd.f32 %v538, 1e-05
    %v540 = vrsqrt.pop %v539
    %v541 = vmul.f32 %v533, %v540
    %v543 = vrot.slane %v524, 3
    %v545 = vmul.f32 %v541, %v543
    %v548 = vrot.slane %v525, 6
    %v549 = vrot.slane %v526, 6
    %v550 = vsel %vm520, %v548, %v549
    %v552 = vadd.f32 %v545, %v550
    %v553 = vmul.f32 %v552, 0.5
    %v554 = vmul.f32 %v552, 0.044715
    %v555 = vmul.f32 %v554, %v552
    %v556 = vmul.f32 %v555, %v552
    %v557 = vadd.f32 %v552, %v556
    %v558 = vmul.f32 %v557, 0.7978846
    %v559 = vtanh.pop %v558
    %v560 = vadd.f32 %v559, 1.0
    %v561 = vmul.f32 %v553, %v560
    %v562 = vpack.c.bf16 %v561, %v561
    %s563 = scalar_lea.vmem [#allocation9], 22
    %v564 = vld [vmem:[%s563] ss:$8 sm:$0x3]
    %v565 = vld [vmem:[#allocation6] sm:$0xff]
    %v566 = vld [vmem:[#allocation6 + $0x8] sm:$0xff]
    %v567 = vld [vmem:[#allocation6 + $0x10] sm:$0xff]
    %v568 = vld [vmem:[#allocation6 + $0x18] sm:$0xff]
    %v569 = vld [vmem:[#allocation6 + $0x20] sm:$0xff]
    %v570 = vld [vmem:[#allocation6 + $0x28] sm:$0xff]
    %v571 = vld [vmem:[#allocation6 + $0x30] sm:$0xff]
    %v572 = vld [vmem:[#allocation6 + $0x38] sm:$0xff]
    %v573 = vld [vmem:[#allocation6 + $0x40] sm:$0xff]
    %v574 = vld [vmem:[#allocation6 + $0x48] sm:$0xff]
    %v575 = vld [vmem:[#allocation6 + $0x50] sm:$0xff]
    %v576 = vld [vmem:[#allocation6 + $0x58] sm:$0xff]
    %v577 = vld [vmem:[#allocation6 + $0x60] sm:$0xff]
    %v578 = vld [vmem:[#allocation6 + $0x68] sm:$0xff]
    %v579 = vld [vmem:[#allocation6 + $0x70] sm:$0xff]
    %v580 = vld [vmem:[#allocation6 + $0x78] sm:$0xff]
    %v597 = vunpack.c.l.b16 %v565
    %v598 = vunpack.c.h.b16 %v565
    %v599 = vunpack.c.l.b16 %v566
    %v600 = vunpack.c.h.b16 %v566
    %v601 = vunpack.c.l.b16 %v567
    %v602 = vunpack.c.h.b16 %v567
    %v603 = vunpack.c.l.b16 %v568
    %v604 = vunpack.c.h.b16 %v568
    %v605 = vunpack.c.l.b16 %v569
    %v606 = vunpack.c.h.b16 %v569
    %v607 = vunpack.c.l.b16 %v570
    %v608 = vunpack.c.h.b16 %v570
    %v609 = vunpack.c.l.b16 %v571
    %v610 = vunpack.c.h.b16 %v571
    %v611 = vunpack.c.l.b16 %v572
    %v612 = vunpack.c.h.b16 %v572
    %v613 = vunpack.c.l.b16 %v573
    %v614 = vunpack.c.h.b16 %v573
    %v615 = vunpack.c.l.b16 %v574
    %v616 = vunpack.c.h.b16 %v574
    %v617 = vunpack.c.l.b16 %v575
    %v618 = vunpack.c.h.b16 %v575
    %v619 = vunpack.c.l.b16 %v576
    %v620 = vunpack.c.h.b16 %v576
    %v621 = vunpack.c.l.b16 %v577
    %v622 = vunpack.c.h.b16 %v577
    %v623 = vunpack.c.l.b16 %v578
    %v624 = vunpack.c.h.b16 %v578
    %v625 = vunpack.c.l.b16 %v579
    %v626 = vunpack.c.h.b16 %v579
    %v627 = vunpack.c.l.b16 %v580
    %v628 = vunpack.c.h.b16 %v580
    %v629 = vpack.c.b16 %v599, %v597
    %v630 = vpack.c.b16 %v600, %v598
    %v631 = vpack.c.b16 %v603, %v601
    %v632 = vpack.c.b16 %v604, %v602
    %v633 = vpack.c.b16 %v607, %v605
    %v634 = vpack.c.b16 %v608, %v606
    %v635 = vpack.c.b16 %v611, %v609
    %v636 = vpack.c.b16 %v612, %v610
    %v637 = vpack.c.b16 %v615, %v613
    %v638 = vpack.c.b16 %v616, %v614
    %v639 = vpack.c.b16 %v619, %v617
    %v640 = vpack.c.b16 %v620, %v618
    %v641 = vpack.c.b16 %v623, %v621
    %v642 = vpack.c.b16 %v624, %v622
    %v643 = vpack.c.b16 %v627, %v625
    %v644 = vpack.c.b16 %v628, %v626
    %661 = vmatprep.subr.bf16.mxu0 %v644
    %662 = vmatpush1.bf16.msra.mxu0 %v643
    %663 = vmatprep.subr.bf16.mxu0 %v642
    %664 = vmatpush1.bf16.msra.mxu0 %v641
    %665 = vmatprep.subr.bf16.mxu0 %v640
    %666 = vmatpush1.bf16.msra.mxu0 %v639
    %667 = vmatprep.subr.bf16.mxu0 %v638
    %668 = vmatpush1.bf16.msra.mxu0 %v637
    %669 = vmatprep.subr.bf16.mxu0 %v636
    %670 = vmatpush1.bf16.msra.mxu0 %v635
    %671 = vmatprep.subr.bf16.mxu0 %v634
    %672 = vmatpush1.bf16.msra.mxu0 %v633
    %673 = vmatprep.subr.bf16.mxu0 %v632
    %674 = vmatpush1.bf16.msra.mxu0 %v631
    %675 = vmatprep.subr.bf16.mxu0 %v630
    %676 = vmatpush1.bf16.msra.mxu0 %v629
    %677 = vmatprep.subr.bf16.mxu0 0
    %678 = vmatpush2.bf16.msra.mxu0 0
    %679 = vmatprep.subr.bf16.mxu0 0
    %680 = vmatpush2.bf16.msra.mxu0 0
    %681 = vmatprep.subr.bf16.mxu0 0
    %682 = vmatpush2.bf16.msra.mxu0 0
    %683 = vmatprep.subr.bf16.mxu0 0
    %684 = vmatpush2.bf16.msra.mxu0 0
    %685 = vmatprep.subr.bf16.mxu0 0
    %686 = vmatpush2.bf16.msra.mxu0 0
    %687 = vmatprep.subr.bf16.mxu0 0
    %688 = vmatpush2.bf16.msra.mxu0 0
    %689 = vmatprep.subr.bf16.mxu0 0
    %690 = vmatpush2.bf16.msra.mxu0 0
    %691 = vmatprep.subr.bf16.mxu0 0
    %692 = vmatpush2.bf16.msra.mxu0 0
    %693 = vmatprep.mubr.bf16.mxu0 0
    %694 = vmatmul.mubr.bf16.gmra.mxu0 %v562
    %v695 = vpop.f32.mrf.mxu0
    %v696 = vadd.f32 0.0, %v695
    %v697 = vpop.f32.mrf.mxu0
    %v698 = vadd.f32 0.0, %v697
    %v699 = vpop.f32.mrf.mxu0
    %v700 = vpop.f32.mrf.mxu0
    %701 = vdwg.mxu0
    %v704 = vcombine.low %v696, %v698
    %v706 = vunpack.c.l.s4 1966171168
    %v707 = vunpack.c.0.s8 %v706
    %v708 = vlaneseq
    %v709 = vshrl.u32 %v708, 7
    %v710 = vsub.s32 %v707, %v709
    %v711 = vrot.slane %v704, %v710
    %v713 = vunpack.c.l.s4 1966171168
    %v714 = vunpack.c.0.s8 %v713
    %v715 = vlaneseq
    %v716 = vshrl.u32 %v715, 7
    %v717 = vsub.s32 %v714, %v716
    %v718 = vrot.slane %v711, %v717
    %v720 = vadd.f32 %v564, %v718
    %v721 = vld [vmem:[#allocation6 + $0x80] sm:$0xff]
    %v722 = vld [vmem:[#allocation6 + $0x88] sm:$0xff]
    %v723 = vld [vmem:[#allocation6 + $0x90] sm:$0xff]
    %v724 = vld [vmem:[#allocation6 + $0x98] sm:$0xff]
    %v725 = vld [vmem:[#allocation6 + $0xa0] sm:$0xff]
    %v726 = vld [vmem:[#allocation6 + $0xa8] sm:$0xff]
    %v727 = vld [vmem:[#allocation6 + $0xb0] sm:$0xff]
    %v728 = vld [vmem:[#allocation6 + $0xb8] sm:$0xff]
    %v729 = vld [vmem:[#allocation6 + $0xc0] sm:$0xff]
    %v730 = vld [vmem:[#allocation6 + $0xc8] sm:$0xff]
    %v731 = vld [vmem:[#allocation6 + $0xd0] sm:$0xff]
    %v732 = vld [vmem:[#allocation6 + $0xd8] sm:$0xff]
    %v733 = vld [vmem:[#allocation6 + $0xe0] sm:$0xff]
    %v734 = vld [vmem:[#allocation6 + $0xe8] sm:$0xff]
    %v735 = vld [vmem:[#allocation6 + $0xf0] sm:$0xff]
    %v736 = vld [vmem:[#allocation6 + $0xf8] sm:$0xff]
    %v738 = vshrl.u32 %v562, 16
    %v757 = vunpack.c.l.b16 %v721
    %v758 = vunpack.c.h.b16 %v721
    %v759 = vunpack.c.l.b16 %v722
    %v760 = vunpack.c.h.b16 %v722
    %v761 = vunpack.c.l.b16 %v723
    %v762 = vunpack.c.h.b16 %v723
    %v763 = vunpack.c.l.b16 %v724
    %v764 = vunpack.c.h.b16 %v724
    %v765 = vunpack.c.l.b16 %v725
    %v766 = vunpack.c.h.b16 %v725
    %v767 = vunpack.c.l.b16 %v726
    %v768 = vunpack.c.h.b16 %v726
    %v769 = vunpack.c.l.b16 %v727
    %v770 = vunpack.c.h.b16 %v727
    %v771 = vunpack.c.l.b16 %v728
    %v772 = vunpack.c.h.b16 %v728
    %v773 = vunpack.c.l.b16 %v729
    %v774 = vunpack.c.h.b16 %v729
    %v775 = vunpack.c.l.b16 %v730
    %v776 = vunpack.c.h.b16 %v730
    %v777 = vunpack.c.l.b16 %v731
    %v778 = vunpack.c.h.b16 %v731
    %v779 = vunpack.c.l.b16 %v732
    %v780 = vunpack.c.h.b16 %v732
    %v781 = vunpack.c.l.b16 %v733
    %v782 = vunpack.c.h.b16 %v733
    %v783 = vunpack.c.l.b16 %v734
    %v784 = vunpack.c.h.b16 %v734
    %v785 = vunpack.c.l.b16 %v735
    %v786 = vunpack.c.h.b16 %v735
    %v787 = vunpack.c.l.b16 %v736
    %v788 = vunpack.c.h.b16 %v736
    %v789 = vpack.c.b16 %v759, %v757
    %v790 = vpack.c.b16 %v760, %v758
    %v791 = vpack.c.b16 %v763, %v761
    %v792 = vpack.c.b16 %v764, %v762
    %v793 = vpack.c.b16 %v767, %v765
    %v794 = vpack.c.b16 %v768, %v766
    %v795 = vpack.c.b16 %v771, %v769
    %v796 = vpack.c.b16 %v772, %v770
    %v797 = vpack.c.b16 %v775, %v773
    %v798 = vpack.c.b16 %v776, %v774
    %v799 = vpack.c.b16 %v779, %v777
    %v800 = vpack.c.b16 %v780, %v778
    %v801 = vpack.c.b16 %v783, %v781
    %v802 = vpack.c.b16 %v784, %v782
    %v803 = vpack.c.b16 %v787, %v785
    %v804 = vpack.c.b16 %v788, %v786
    %821 = vmatprep.subr.bf16.mxu0 %v804
    %822 = vmatpush1.bf16.msra.mxu0 %v803
    %823 = vmatprep.subr.bf16.mxu0 %v802
    %824 = vmatpush1.bf16.msra.mxu0 %v801
    %825 = vmatprep.subr.bf16.mxu0 %v800
    %826 = vmatpush1.bf16.msra.mxu0 %v799
    %827 = vmatprep.subr.bf16.mxu0 %v798
    %828 = vmatpush1.bf16.msra.mxu0 %v797
    %829 = vmatprep.subr.bf16.mxu0 %v796
    %830 = vmatpush1.bf16.msra.mxu0 %v795
    %831 = vmatprep.subr.bf16.mxu0 %v794
    %832 = vmatpush1.bf16.msra.mxu0 %v793
    %833 = vmatprep.subr.bf16.mxu0 %v792
    %834 = vmatpush1.bf16.msra.mxu0 %v791
    %835 = vmatprep.subr.bf16.mxu0 %v790
    %836 = vmatpush1.bf16.msra.mxu0 %v789
    %837 = vmatprep.subr.bf16.mxu0 0
    %838 = vmatpush2.bf16.msra.mxu0 0
    %839 = vmatprep.subr.bf16.mxu0 0
    %840 = vmatpush2.bf16.msra.mxu0 0
    %841 = vmatprep.subr.bf16.mxu0 0
    %842 = vmatpush2.bf16.msra.mxu0 0
    %843 = vmatprep.subr.bf16.mxu0 0
    %844 = vmatpush2.bf16.msra.mxu0 0
    %845 = vmatprep.subr.bf16.mxu0 0
    %846 = vmatpush2.bf16.msra.mxu0 0
    %847 = vmatprep.subr.bf16.mxu0 0
    %848 = vmatpush2.bf16.msra.mxu0 0
    %849 = vmatprep.subr.bf16.mxu0 0
    %850 = vmatpush2.bf16.msra.mxu0 0
    %851 = vmatprep.subr.bf16.mxu0 0
    %852 = vmatpush2.bf16.msra.mxu0 0
    %853 = vmatprep.mubr.bf16.mxu0 0
    %854 = vmatmul.mubr.bf16.gmra.mxu0 %v738
    %v855 = vpop.f32.mrf.mxu0
    %v856 = vadd.f32 0.0, %v855
    %v857 = vpop.f32.mrf.mxu0
    %v858 = vadd.f32 0.0, %v857
    %v859 = vpop.f32.mrf.mxu0
    %v860 = vpop.f32.mrf.mxu0
    %861 = vdwg.mxu0
    %v864 = vcombine.low %v856, %v858
    %v866 = vunpack.c.l.s4 1966171168
    %v867 = vunpack.c.0.s8 %v866
    %v868 = vlaneseq
    %v869 = vshrl.u32 %v868, 7
    %v870 = vsub.s32 %v867, %v869
    %v871 = vrot.slane %v864, %v870
    %v873 = vunpack.c.l.s4 1966171168
    %v874 = vunpack.c.0.s8 %v873
    %v875 = vlaneseq
    %v876 = vshrl.u32 %v875, 7
    %v877 = vsub.s32 %v874, %v876
    %v878 = vrot.slane %v871, %v877
    %v880 = vadd.f32 %v720, %v878
    %v881 = vld [vmem:[#allocation6 + $0x100] sm:$0xff]
    %v882 = vld [vmem:[#allocation6 + $0x108] sm:$0xff]
    %v883 = vld [vmem:[#allocation6 + $0x110] sm:$0xff]
    %v884 = vld [vmem:[#allocation6 + $0x118] sm:$0xff]
    %v885 = vld [vmem:[#allocation6 + $0x120] sm:$0xff]
    %v886 = vld [vmem:[#allocation6 + $0x128] sm:$0xff]
    %v887 = vld [vmem:[#allocation6 + $0x130] sm:$0xff]
    %v888 = vld [vmem:[#allocation6 + $0x138] sm:$0xff]
    %v889 = vld [vmem:[#allocation6 + $0x140] sm:$0xff]
    %v890 = vld [vmem:[#allocation6 + $0x148] sm:$0xff]
    %v891 = vld [vmem:[#allocation6 + $0x150] sm:$0xff]
    %v892 = vld [vmem:[#allocation6 + $0x158] sm:$0xff]
    %v893 = vld [vmem:[#allocation6 + $0x160] sm:$0xff]
    %v894 = vld [vmem:[#allocation6 + $0x168] sm:$0xff]
    %v895 = vld [vmem:[#allocation6 + $0x170] sm:$0xff]
    %v896 = vld [vmem:[#allocation6 + $0x178] sm:$0xff]
    %v898 = vrot.slane %v562, 1
    %v916 = vunpack.c.l.b16 %v881
    %v917 = vunpack.c.h.b16 %v881
    %v918 = vunpack.c.l.b16 %v882
    %v919 = vunpack.c.h.b16 %v882
    %v920 = vunpack.c.l.b16 %v883
    %v921 = vunpack.c.h.b16 %v883
    %v922 = vunpack.c.l.b16 %v884
    %v923 = vunpack.c.h.b16 %v884
    %v924 = vunpack.c.l.b16 %v885
    %v925 = vunpack.c.h.b16 %v885
    %v926 = vunpack.c.l.b16 %v886
    %v927 = vunpack.c.h.b16 %v886
    %v928 = vunpack.c.l.b16 %v887
    %v929 = vunpack.c.h.b16 %v887
    %v930 = vunpack.c.l.b16 %v888
    %v931 = vunpack.c.h.b16 %v888
    %v932 = vunpack.c.l.b16 %v889
    %v933 = vunpack.c.h.b16 %v889
    %v934 = vunpack.c.l.b16 %v890
    %v935 = vunpack.c.h.b16 %v890
    %v936 = vunpack.c.l.b16 %v891
    %v937 = vunpack.c.h.b16 %v891
    %v938 = vunpack.c.l.b16 %v892
    %v939 = vunpack.c.h.b16 %v892
    %v940 = vunpack.c.l.b16 %v893
    %v941 = vunpack.c.h.b16 %v893
    %v942 = vunpack.c.l.b16 %v894
    %v943 = vunpack.c.h.b16 %v894
    %v944 = vunpack.c.l.b16 %v895
    %v945 = vunpack.c.h.b16 %v895
    %v946 = vunpack.c.l.b16 %v896
    %v947 = vunpack.c.h.b16 %v896
    %v948 = vpack.c.b16 %v918, %v916
    %v949 = vpack.c.b16 %v919, %v917
    %v950 = vpack.c.b16 %v922, %v920
    %v951 = vpack.c.b16 %v923, %v921
    %v952 = vpack.c.b16 %v926, %v924
    %v953 = vpack.c.b16 %v927, %v925
    %v954 = vpack.c.b16 %v930, %v928
    %v955 = vpack.c.b16 %v931, %v929
    %v956 = vpack.c.b16 %v934, %v932
    %v957 = vpack.c.b16 %v935, %v933
    %v958 = vpack.c.b16 %v938, %v936
    %v959 = vpack.c.b16 %v939, %v937
    %v960 = vpack.c.b16 %v942, %v940
    %v961 = vpack.c.b16 %v943, %v941
    %v962 = vpack.c.b16 %v946, %v944
    %v963 = vpack.c.b16 %v947, %v945
    %980 = vmatprep.subr.bf16.mxu0 %v963
    %981 = vmatpush1.bf16.msra.mxu0 %v962
    %982 = vmatprep.subr.bf16.mxu0 %v961
    %983 = vmatpush1.bf16.msra.mxu0 %v960
    %984 = vmatprep.subr.bf16.mxu0 %v959
    %985 = vmatpush1.bf16.msra.mxu0 %v958
    %986 = vmatprep.subr.bf16.mxu0 %v957
    %987 = vmatpush1.bf16.msra.mxu0 %v956
    %988 = vmatprep.subr.bf16.mxu0 %v955
    %989 = vmatpush1.bf16.msra.mxu0 %v954
    %990 = vmatprep.subr.bf16.mxu0 %v953
    %991 = vmatpush1.bf16.msra.mxu0 %v952
    %992 = vmatprep.subr.bf16.mxu0 %v951
    %993 = vmatpush1.bf16.msra.mxu0 %v950
    %994 = vmatprep.subr.bf16.mxu0 %v949
    %995 = vmatpush1.bf16.msra.mxu0 %v948
    %996 = vmatprep.subr.bf16.mxu0 0
    %997 = vmatpush2.bf16.msra.mxu0 0
    %998 = vmatprep.subr.bf16.mxu0 0
    %999 = vmatpush2.bf16.msra.mxu0 0
    %1000 = vmatprep.subr.bf16.mxu0 0
    %1001 = vmatpush2.bf16.msra.mxu0 0
    %1002 = vmatprep.subr.bf16.mxu0 0
    %1003 = vmatpush2.bf16.msra.mxu0 0
    %1004 = vmatprep.subr.bf16.mxu0 0
    %1005 = vmatpush2.bf16.msra.mxu0 0
    %1006 = vmatprep.subr.bf16.mxu0 0
    %1007 = vmatpush2.bf16.msra.mxu0 0
    %1008 = vmatprep.subr.bf16.mxu0 0
    %1009 = vmatpush2.bf16.msra.mxu0 0
    %1010 = vmatprep.subr.bf16.mxu0 0
    %1011 = vmatpush2.bf16.msra.mxu0 0
    %1012 = vmatprep.mubr.bf16.mxu0 0
    %1013 = vmatmul.mubr.bf16.gmra.mxu0 %v898
    %v1014 = vpop.f32.mrf.mxu0
    %v1015 = vadd.f32 0.0, %v1014
    %v1016 = vpop.f32.mrf.mxu0
    %v1017 = vadd.f32 0.0, %v1016
    %v1018 = vpop.f32.mrf.mxu0
    %v1019 = vpop.f32.mrf.mxu0
    %1020 = vdwg.mxu0
    %v1023 = vcombine.low %v1015, %v1017
    %v1025 = vunpack.c.l.s4 1966171168
    %v1026 = vunpack.c.0.s8 %v1025
    %v1027 = vlaneseq
    %v1028 = vshrl.u32 %v1027, 7
    %v1029 = vsub.s32 %v1026, %v1028
    %v1030 = vrot.slane %v1023, %v1029
    %v1032 = vunpack.c.l.s4 1966171168
    %v1033 = vunpack.c.0.s8 %v1032
    %v1034 = vlaneseq
    %v1035 = vshrl.u32 %v1034, 7
    %v1036 = vsub.s32 %v1033, %v1035
    %v1037 = vrot.slane %v1030, %v1036
    %v1039 = vadd.f32 %v880, %v1037
    %s1040 = scalar_lea.vmem [#allocation9], 23
    %v1041 = vld [vmem:[%s1040] ss:$8 sm:$0x3]
    %s1042 = scalar_lea.vmem [#allocation9], 32
    %v1043 = vld [vmem:[%s1042] ss:$8 sm:$0x3]
    %v1045 = vlaneseq
    %v1046 = vshrl.u32 %v1045, 7
    %v1047 = vsub.s32 0, %v1046
    %v1048 = vrot.slane %v1039, %v1047
    %v1049 = vlaneseq
    %v1050 = vshrl.u32 %v1049, 7
    %v1051 = vsub.s32 1, %v1050
    %v1052 = vrot.slane %v1039, %v1051
    %v1055 = vsel %vm518, %v1048, 0.0
    %v1056 = vsel %vm518, %v1052, 0.0
    %v1057 = vadd.f32 %v1055, %v1056
    %1058 = vadd.xlane.f32.xlu0 %v1057
    %v1059 = vpop.xlane.xlu0 %1058
    %v1060 = vrcp.pop 256.0
    %v1061 = vmul.f32 %v1059, %v1060
    %v1063 = vlaneseq
    %v1064 = vshrl.u32 %v1063, 7
    %v1065 = vsub.s32 0, %v1064
    %v1066 = vrot.slane %v1061, %v1065
    %v1068 = vsub.f32 %v1039, %v1066
    %v1069 = vmul.f32 %v1068, %v1068
    %v1071 = vlaneseq
    %v1072 = vshrl.u32 %v1071, 7
    %v1073 = vsub.s32 0, %v1072
    %v1074 = vrot.slane %v1069, %v1073
    %v1075 = vlaneseq
    %v1076 = vshrl.u32 %v1075, 7
    %v1077 = vsub.s32 1, %v1076
    %v1078 = vrot.slane %v1069, %v1077
    %v1081 = vsel %vm518, %v1074, 0.0
    %v1082 = vsel %vm518, %v1078, 0.0
    %v1083 = vadd.f32 %v1081, %v1082
    %1084 = vadd.xlane.f32.xlu0 %v1083
    %v1085 = vpop.xlane.xlu0 %1084
    %v1086 = vmul.f32 %v1085, %v1060
    %v1087 = vadd.f32 %v1086, 1e-05
    %v1088 = vrsqrt.pop %v1087
    %v1090 = vlaneseq
    %v1091 = vshrl.u32 %v1090, 7
    %v1092 = vsub.s32 0, %v1091
    %v1093 = vrot.slane %v1088, %v1092
    %v1095 = vmul.f32 %v1068, %v1093
    %v1096 = vmul.f32 %v1095, %v1041
    %v1097 = vadd.f32 %v1096, %v1043
    %v1098 = vmul.f32 %v1097, 0.5
    %v1099 = vmul.f32 %v1097, 0.044715
    %v1100 = vmul.f32 %v1099, %v1097
    %v1101 = vmul.f32 %v1100, %v1097
    %v1102 = vadd.f32 %v1097, %v1101
    %v1103 = vmul.f32 %v1102, 0.7978846
    %v1104 = vtanh.pop %v1103
    %v1105 = vadd.f32 %v1104, 1.0
    %v1106 = vmul.f32 %v1098, %v1105
    %v1108 = vlaneseq
    %v1109 = vshrl.u32 %v1108, 7
    %v1110 = vsub.s32 0, %v1109
    %v1111 = vrot.slane %v1106, %v1110
    %v1112 = vlaneseq
    %v1113 = vshrl.u32 %v1112, 7
    %v1114 = vsub.s32 1, %v1113
    %v1115 = vrot.slane %v1106, %v1114
    %v1118 = vpack.c.bf16 %v1111, %v1111
    %v1119 = vpack.c.bf16 %v1115, %v1115
    %v1120 = vld [vmem:[#allocation7] sm:$0xf]
    %v1121 = vld [vmem:[#allocation7 + $0x4] sm:$0xf]
    %v1122 = vld [vmem:[#allocation7 + $0x8] sm:$0xf]
    %v1123 = vld [vmem:[#allocation7 + $0xc] sm:$0xf]
    %v1124 = vld [vmem:[#allocation7 + $0x10] sm:$0xf]
    %v1125 = vld [vmem:[#allocation7 + $0x14] sm:$0xf]
    %v1126 = vld [vmem:[#allocation7 + $0x18] sm:$0xf]
    %v1127 = vld [vmem:[#allocation7 + $0x1c] sm:$0xf]
    %v1128 = vld [vmem:[#allocation7 + $0x20] sm:$0xf]
    %v1129 = vld [vmem:[#allocation7 + $0x24] sm:$0xf]
    %v1130 = vld [vmem:[#allocation7 + $0x28] sm:$0xf]
    %v1131 = vld [vmem:[#allocation7 + $0x2c] sm:$0xf]
    %v1132 = vld [vmem:[#allocation7 + $0x30] sm:$0xf]
    %v1133 = vld [vmem:[#allocation7 + $0x34] sm:$0xf]
    %v1134 = vld [vmem:[#allocation7 + $0x38] sm:$0xf]
    %v1135 = vld [vmem:[#allocation7 + $0x3c] sm:$0xf]
    %v1136 = vld [vmem:[#allocation7 + $0x40] sm:$0xf]
    %v1137 = vld [vmem:[#allocation7 + $0x44] sm:$0xf]
    %v1138 = vld [vmem:[#allocation7 + $0x48] sm:$0xf]
    %v1139 = vld [vmem:[#allocation7 + $0x4c] sm:$0xf]
    %v1140 = vld [vmem:[#allocation7 + $0x50] sm:$0xf]
    %v1141 = vld [vmem:[#allocation7 + $0x54] sm:$0xf]
    %v1142 = vld [vmem:[#allocation7 + $0x58] sm:$0xf]
    %v1143 = vld [vmem:[#allocation7 + $0x5c] sm:$0xf]
    %v1144 = vld [vmem:[#allocation7 + $0x60] sm:$0xf]
    %v1145 = vld [vmem:[#allocation7 + $0x64] sm:$0xf]
    %v1146 = vld [vmem:[#allocation7 + $0x68] sm:$0xf]
    %v1147 = vld [vmem:[#allocation7 + $0x6c] sm:$0xf]
    %v1148 = vld [vmem:[#allocation7 + $0x70] sm:$0xf]
    %v1149 = vld [vmem:[#allocation7 + $0x74] sm:$0xf]
    %v1150 = vld [vmem:[#allocation7 + $0x78] sm:$0xf]
    %v1151 = vld [vmem:[#allocation7 + $0x7c] sm:$0xf]
    %v1152 = vld [vmem:[#allocation9 + $0x11] ss:$0 sm:$0xff]
    %v1185 = vunpack.c.l.b16 %v1120
    %v1186 = vunpack.c.l.b16 %v1121
    %v1187 = vunpack.c.l.b16 %v1122
    %v1188 = vunpack.c.l.b16 %v1123
    %v1189 = vunpack.c.l.b16 %v1124
    %v1190 = vunpack.c.l.b16 %v1125
    %v1191 = vunpack.c.l.b16 %v1126
    %v1192 = vunpack.c.l.b16 %v1127
    %v1193 = vunpack.c.l.b16 %v1128
    %v1194 = vunpack.c.l.b16 %v1129
    %v1195 = vunpack.c.l.b16 %v1130
    %v1196 = vunpack.c.l.b16 %v1131
    %v1197 = vunpack.c.l.b16 %v1132
    %v1198 = vunpack.c.l.b16 %v1133
    %v1199 = vunpack.c.l.b16 %v1134
    %v1200 = vunpack.c.l.b16 %v1135
    %v1201 = vunpack.c.l.b16 %v1136
    %v1202 = vunpack.c.l.b16 %v1137
    %v1203 = vunpack.c.l.b16 %v1138
    %v1204 = vunpack.c.l.b16 %v1139
    %v1205 = vunpack.c.l.b16 %v1140
    %v1206 = vunpack.c.l.b16 %v1141
    %v1207 = vunpack.c.l.b16 %v1142
    %v1208 = vunpack.c.l.b16 %v1143
    %v1209 = vunpack.c.l.b16 %v1144
    %v1210 = vunpack.c.l.b16 %v1145
    %v1211 = vunpack.c.l.b16 %v1146
    %v1212 = vunpack.c.l.b16 %v1147
    %v1213 = vunpack.c.l.b16 %v1148
    %v1214 = vunpack.c.l.b16 %v1149
    %v1215 = vunpack.c.l.b16 %v1150
    %v1216 = vunpack.c.l.b16 %v1151
    %v1217 = vpack.c.b16 %v1186, %v1185
    %v1218 = vpack.c.b16 %v1188, %v1187
    %v1219 = vpack.c.b16 %v1190, %v1189
    %v1220 = vpack.c.b16 %v1192, %v1191
    %v1221 = vpack.c.b16 %v1194, %v1193
    %v1222 = vpack.c.b16 %v1196, %v1195
    %v1223 = vpack.c.b16 %v1198, %v1197
    %v1224 = vpack.c.b16 %v1200, %v1199
    %v1225 = vpack.c.b16 %v1202, %v1201
    %v1226 = vpack.c.b16 %v1204, %v1203
    %v1227 = vpack.c.b16 %v1206, %v1205
    %v1228 = vpack.c.b16 %v1208, %v1207
    %v1229 = vpack.c.b16 %v1210, %v1209
    %v1230 = vpack.c.b16 %v1212, %v1211
    %v1231 = vpack.c.b16 %v1214, %v1213
    %v1232 = vpack.c.b16 %v1216, %v1215
    %1249 = vmatprep.subr.bf16.mxu0 0
    %1250 = vmatpush1.bf16.msra.mxu0 %v1224
    %1251 = vmatprep.subr.bf16.mxu0 0
    %1252 = vmatpush1.bf16.msra.mxu0 %v1223
    %1253 = vmatprep.subr.bf16.mxu0 0
    %1254 = vmatpush1.bf16.msra.mxu0 %v1222
    %1255 = vmatprep.subr.bf16.mxu0 0
    %1256 = vmatpush1.bf16.msra.mxu0 %v1221
    %1257 = vmatprep.subr.bf16.mxu0 0
    %1258 = vmatpush1.bf16.msra.mxu0 %v1220
    %1259 = vmatprep.subr.bf16.mxu0 0
    %1260 = vmatpush1.bf16.msra.mxu0 %v1219
    %1261 = vmatprep.subr.bf16.mxu0 0
    %1262 = vmatpush1.bf16.msra.mxu0 %v1218
    %1263 = vmatprep.subr.bf16.mxu0 0
    %1264 = vmatpush1.bf16.msra.mxu0 %v1217
    %1265 = vmatprep.subr.bf16.mxu0 0
    %1266 = vmatpush2.bf16.msra.mxu0 %v1232
    %1267 = vmatprep.subr.bf16.mxu0 0
    %1268 = vmatpush2.bf16.msra.mxu0 %v1231
    %1269 = vmatprep.subr.bf16.mxu0 0
    %1270 = vmatpush2.bf16.msra.mxu0 %v1230
    %1271 = vmatprep.subr.bf16.mxu0 0
    %1272 = vmatpush2.bf16.msra.mxu0 %v1229
    %1273 = vmatprep.subr.bf16.mxu0 0
    %1274 = vmatpush2.bf16.msra.mxu0 %v1228
    %1275 = vmatprep.subr.bf16.mxu0 0
    %1276 = vmatpush2.bf16.msra.mxu0 %v1227
    %1277 = vmatprep.subr.bf16.mxu0 0
    %1278 = vmatpush2.bf16.msra.mxu0 %v1226
    %1279 = vmatprep.subr.bf16.mxu0 0
    %1280 = vmatpush2.bf16.msra.mxu0 %v1225
    %1281 = vmatprep.mubr.bf16.mxu0 %v1119
    %1282 = vmatmul.mubr.bf16.gmra.mxu0 %v1118
    %v1283 = vpop.f32.mrf.mxu0
    %v1284 = vadd.f32 %v1152, %v1283
    %v1285 = vpop.f32.mrf.mxu0
    %v1286 = vpop.f32.mrf.mxu0
    %v1287 = vpop.f32.mrf.mxu0
    %1288 = vdwg.mxu0
    %v1289 = vld [vmem:[#allocation9 + $0x12] ss:$0 sm:$0xff]
    %v1290 = vld [vmem:[#allocation7 + $0x80] sm:$0xf]
    %v1291 = vld [vmem:[#allocation7 + $0x84] sm:$0xf]
    %v1292 = vld [vmem:[#allocation7 + $0x88] sm:$0xf]
    %v1293 = vld [vmem:[#allocation7 + $0x8c] sm:$0xf]
    %v1294 = vld [vmem:[#allocation7 + $0x90] sm:$0xf]
    %v1295 = vld [vmem:[#allocation7 + $0x94] sm:$0xf]
    %v1296 = vld [vmem:[#allocation7 + $0x98] sm:$0xf]
    %v1297 = vld [vmem:[#allocation7 + $0x9c] sm:$0xf]
    %v1298 = vld [vmem:[#allocation7 + $0xa0] sm:$0xf]
    %v1299 = vld [vmem:[#allocation7 + $0xa4] sm:$0xf]
    %v1300 = vld [vmem:[#allocation7 + $0xa8] sm:$0xf]
    %v1301 = vld [vmem:[#allocation7 + $0xac] sm:$0xf]
    %v1302 = vld [vmem:[#allocation7 + $0xb0] sm:$0xf]
    %v1303 = vld [vmem:[#allocation7 + $0xb4] sm:$0xf]
    %v1304 = vld [vmem:[#allocation7 + $0xb8] sm:$0xf]
    %v1305 = vld [vmem:[#allocation7 + $0xbc] sm:$0xf]
    %v1322 = vunpack.c.l.b16 %v1290
    %v1323 = vunpack.c.l.b16 %v1291
    %v1324 = vunpack.c.l.b16 %v1292
    %v1325 = vunpack.c.l.b16 %v1293
    %v1326 = vunpack.c.l.b16 %v1294
    %v1327 = vunpack.c.l.b16 %v1295
    %v1328 = vunpack.c.l.b16 %v1296
    %v1329 = vunpack.c.l.b16 %v1297
    %v1330 = vunpack.c.l.b16 %v1298
    %v1331 = vunpack.c.l.b16 %v1299
    %v1332 = vunpack.c.l.b16 %v1300
    %v1333 = vunpack.c.l.b16 %v1301
    %v1334 = vunpack.c.l.b16 %v1302
    %v1335 = vunpack.c.l.b16 %v1303
    %v1336 = vunpack.c.l.b16 %v1304
    %v1337 = vunpack.c.l.b16 %v1305
    %v1338 = vpack.c.b16 %v1323, %v1322
    %v1339 = vpack.c.b16 %v1325, %v1324
    %v1340 = vpack.c.b16 %v1327, %v1326
    %v1341 = vpack.c.b16 %v1329, %v1328
    %v1342 = vpack.c.b16 %v1331, %v1330
    %v1343 = vpack.c.b16 %v1333, %v1332
    %v1344 = vpack.c.b16 %v1335, %v1334
    %v1345 = vpack.c.b16 %v1337, %v1336
    %1354 = vmatprep.subr.bf16.mxu0 0
    %1355 = vmatpush1.bf16.msra.mxu0 %v1345
    %1356 = vmatprep.subr.bf16.mxu0 0
    %1357 = vmatpush1.bf16.msra.mxu0 %v1344
    %1358 = vmatprep.subr.bf16.mxu0 0
    %1359 = vmatpush1.bf16.msra.mxu0 %v1343
    %1360 = vmatprep.subr.bf16.mxu0 0
    %1361 = vmatpush1.bf16.msra.mxu0 %v1342
    %1362 = vmatprep.subr.bf16.mxu0 0
    %1363 = vmatpush1.bf16.msra.mxu0 %v1341
    %1364 = vmatprep.subr.bf16.mxu0 0
    %1365 = vmatpush1.bf16.msra.mxu0 %v1340
    %1366 = vmatprep.subr.bf16.mxu0 0
    %1367 = vmatpush1.bf16.msra.mxu0 %v1339
    %1368 = vmatprep.subr.bf16.mxu0 0
    %1369 = vmatpush1.bf16.msra.mxu0 %v1338
    %1370 = vmatprep.subr.bf16.mxu0 0
    %1371 = vmatpush2.bf16.msra.mxu0 0
    %1372 = vmatprep.subr.bf16.mxu0 0
    %1373 = vmatpush2.bf16.msra.mxu0 0
    %1374 = vmatprep.subr.bf16.mxu0 0
    %1375 = vmatpush2.bf16.msra.mxu0 0
    %1376 = vmatprep.subr.bf16.mxu0 0
    %1377 = vmatpush2.bf16.msra.mxu0 0
    %1378 = vmatprep.subr.bf16.mxu0 0
    %1379 = vmatpush2.bf16.msra.mxu0 0
    %1380 = vmatprep.subr.bf16.mxu0 0
    %1381 = vmatpush2.bf16.msra.mxu0 0
    %1382 = vmatprep.subr.bf16.mxu0 0
    %1383 = vmatpush2.bf16.msra.mxu0 0
    %1384 = vmatprep.subr.bf16.mxu0 0
    %1385 = vmatpush2.bf16.msra.mxu0 0
    %1386 = vmatprep.mubr.bf16.mxu0 0
    %1387 = vmatmul.mubr.bf16.gmra.mxu0 %v88
    %v1388 = vpop.f32.mrf.mxu0
    %v1389 = vadd.f32 0.0, %v1388
    %v1390 = vpop.f32.mrf.mxu0
    %v1391 = vpop.f32.mrf.mxu0
    %v1392 = vpop.f32.mrf.mxu0
    %1393 = vdwg.mxu0
    %v1394 = vadd.f32 %v1289, %v1389
    %v1395 = vld [vmem:[#allocation7 + $0xc0] sm:$0xf]
    %v1396 = vld [vmem:[#allocation7 + $0xc4] sm:$0xf]
    %v1397 = vld [vmem:[#allocation7 + $0xc8] sm:$0xf]
    %v1398 = vld [vmem:[#allocation7 + $0xcc] sm:$0xf]
    %v1399 = vld [vmem:[#allocation7 + $0xd0] sm:$0xf]
    %v1400 = vld [vmem:[#allocation7 + $0xd4] sm:$0xf]
    %v1401 = vld [vmem:[#allocation7 + $0xd8] sm:$0xf]
    %v1402 = vld [vmem:[#allocation7 + $0xdc] sm:$0xf]
    %v1403 = vld [vmem:[#allocation7 + $0xe0] sm:$0xf]
    %v1404 = vld [vmem:[#allocation7 + $0xe4] sm:$0xf]
    %v1405 = vld [vmem:[#allocation7 + $0xe8] sm:$0xf]
    %v1406 = vld [vmem:[#allocation7 + $0xec] sm:$0xf]
    %v1407 = vld [vmem:[#allocation7 + $0xf0] sm:$0xf]
    %v1408 = vld [vmem:[#allocation7 + $0xf4] sm:$0xf]
    %v1409 = vld [vmem:[#allocation7 + $0xf8] sm:$0xf]
    %v1410 = vld [vmem:[#allocation7 + $0xfc] sm:$0xf]
    %v1412 = vshrl.u32 %v88, 16
    %v1431 = vunpack.c.l.b16 %v1395
    %v1432 = vunpack.c.l.b16 %v1396
    %v1433 = vunpack.c.l.b16 %v1397
    %v1434 = vunpack.c.l.b16 %v1398
    %v1435 = vunpack.c.l.b16 %v1399
    %v1436 = vunpack.c.l.b16 %v1400
    %v1437 = vunpack.c.l.b16 %v1401
    %v1438 = vunpack.c.l.b16 %v1402
    %v1439 = vunpack.c.l.b16 %v1403
    %v1440 = vunpack.c.l.b16 %v1404
    %v1441 = vunpack.c.l.b16 %v1405
    %v1442 = vunpack.c.l.b16 %v1406
    %v1443 = vunpack.c.l.b16 %v1407
    %v1444 = vunpack.c.l.b16 %v1408
    %v1445 = vunpack.c.l.b16 %v1409
    %v1446 = vunpack.c.l.b16 %v1410
    %v1447 = vpack.c.b16 %v1432, %v1431
    %v1448 = vpack.c.b16 %v1434, %v1433
    %v1449 = vpack.c.b16 %v1436, %v1435
    %v1450 = vpack.c.b16 %v1438, %v1437
    %v1451 = vpack.c.b16 %v1440, %v1439
    %v1452 = vpack.c.b16 %v1442, %v1441
    %v1453 = vpack.c.b16 %v1444, %v1443
    %v1454 = vpack.c.b16 %v1446, %v1445
    %1463 = vmatprep.subr.bf16.mxu0 0
    %1464 = vmatpush1.bf16.msra.mxu0 %v1454
    %1465 = vmatprep.subr.bf16.mxu0 0
    %1466 = vmatpush1.bf16.msra.mxu0 %v1453
    %1467 = vmatprep.subr.bf16.mxu0 0
    %1468 = vmatpush1.bf16.msra.mxu0 %v1452
    %1469 = vmatprep.subr.bf16.mxu0 0
    %1470 = vmatpush1.bf16.msra.mxu0 %v1451
    %1471 = vmatprep.subr.bf16.mxu0 0
    %1472 = vmatpush1.bf16.msra.mxu0 %v1450
    %1473 = vmatprep.subr.bf16.mxu0 0
    %1474 = vmatpush1.bf16.msra.mxu0 %v1449
    %1475 = vmatprep.subr.bf16.mxu0 0
    %1476 = vmatpush1.bf16.msra.mxu0 %v1448
    %1477 = vmatprep.subr.bf16.mxu0 0
    %1478 = vmatpush1.bf16.msra.mxu0 %v1447
    %1479 = vmatprep.subr.bf16.mxu0 0
    %1480 = vmatpush2.bf16.msra.mxu0 0
    %1481 = vmatprep.subr.bf16.mxu0 0
    %1482 = vmatpush2.bf16.msra.mxu0 0
    %1483 = vmatprep.subr.bf16.mxu0 0
    %1484 = vmatpush2.bf16.msra.mxu0 0
    %1485 = vmatprep.subr.bf16.mxu0 0
    %1486 = vmatpush2.bf16.msra.mxu0 0
    %1487 = vmatprep.subr.bf16.mxu0 0
    %1488 = vmatpush2.bf16.msra.mxu0 0
    %1489 = vmatprep.subr.bf16.mxu0 0
    %1490 = vmatpush2.bf16.msra.mxu0 0
    %1491 = vmatprep.subr.bf16.mxu0 0
    %1492 = vmatpush2.bf16.msra.mxu0 0
    %1493 = vmatprep.subr.bf16.mxu0 0
    %1494 = vmatpush2.bf16.msra.mxu0 0
    %1495 = vmatprep.mubr.bf16.mxu0 0
    %1496 = vmatmul.mubr.bf16.gmra.mxu0 %v1412
    %v1497 = vpop.f32.mrf.mxu0
    %v1498 = vadd.f32 0.0, %v1497
    %v1499 = vpop.f32.mrf.mxu0
    %v1500 = vpop.f32.mrf.mxu0
    %v1501 = vpop.f32.mrf.mxu0
    %1502 = vdwg.mxu0
    %v1503 = vadd.f32 %v1394, %v1498
    %v1504 = vld [vmem:[#allocation7 + $0x100] sm:$0xf]
    %v1505 = vld [vmem:[#allocation7 + $0x104] sm:$0xf]
    %v1506 = vld [vmem:[#allocation7 + $0x108] sm:$0xf]
    %v1507 = vld [vmem:[#allocation7 + $0x10c] sm:$0xf]
    %v1508 = vld [vmem:[#allocation7 + $0x110] sm:$0xf]
    %v1509 = vld [vmem:[#allocation7 + $0x114] sm:$0xf]
    %v1510 = vld [vmem:[#allocation7 + $0x118] sm:$0xf]
    %v1511 = vld [vmem:[#allocation7 + $0x11c] sm:$0xf]
    %v1512 = vld [vmem:[#allocation7 + $0x120] sm:$0xf]
    %v1513 = vld [vmem:[#allocation7 + $0x124] sm:$0xf]
    %v1514 = vld [vmem:[#allocation7 + $0x128] sm:$0xf]
    %v1515 = vld [vmem:[#allocation7 + $0x12c] sm:$0xf]
    %v1516 = vld [vmem:[#allocation7 + $0x130] sm:$0xf]
    %v1517 = vld [vmem:[#allocation7 + $0x134] sm:$0xf]
    %v1518 = vld [vmem:[#allocation7 + $0x138] sm:$0xf]
    %v1519 = vld [vmem:[#allocation7 + $0x13c] sm:$0xf]
    %v1521 = vrot.slane %v88, 1
    %v1539 = vunpack.c.l.b16 %v1504
    %v1540 = vunpack.c.l.b16 %v1505
    %v1541 = vunpack.c.l.b16 %v1506
    %v1542 = vunpack.c.l.b16 %v1507
    %v1543 = vunpack.c.l.b16 %v1508
    %v1544 = vunpack.c.l.b16 %v1509
    %v1545 = vunpack.c.l.b16 %v1510
    %v1546 = vunpack.c.l.b16 %v1511
    %v1547 = vunpack.c.l.b16 %v1512
    %v1548 = vunpack.c.l.b16 %v1513
    %v1549 = vunpack.c.l.b16 %v1514
    %v1550 = vunpack.c.l.b16 %v1515
    %v1551 = vunpack.c.l.b16 %v1516
    %v1552 = vunpack.c.l.b16 %v1517
    %v1553 = vunpack.c.l.b16 %v1518
    %v1554 = vunpack.c.l.b16 %v1519
    %v1555 = vpack.c.b16 %v1540, %v1539
    %v1556 = vpack.c.b16 %v1542, %v1541
    %v1557 = vpack.c.b16 %v1544, %v1543
    %v1558 = vpack.c.b16 %v1546, %v1545
    %v1559 = vpack.c.b16 %v1548, %v1547
    %v1560 = vpack.c.b16 %v1550, %v1549
    %v1561 = vpack.c.b16 %v1552, %v1551
    %v1562 = vpack.c.b16 %v1554, %v1553
    %1571 = vmatprep.subr.bf16.mxu0 0
    %1572 = vmatpush1.bf16.msra.mxu0 %v1562
    %1573 = vmatprep.subr.bf16.mxu0 0
    %1574 = vmatpush1.bf16.msra.mxu0 %v1561
    %1575 = vmatprep.subr.bf16.mxu0 0
    %1576 = vmatpush1.bf16.msra.mxu0 %v1560
    %1577 = vmatprep.subr.bf16.mxu0 0
    %1578 = vmatpush1.bf16.msra.mxu0 %v1559
    %1579 = vmatprep.subr.bf16.mxu0 0
    %1580 = vmatpush1.bf16.msra.mxu0 %v1558
    %1581 = vmatprep.subr.bf16.mxu0 0
    %1582 = vmatpush1.bf16.msra.mxu0 %v1557
    %1583 = vmatprep.subr.bf16.mxu0 0
    %1584 = vmatpush1.bf16.msra.mxu0 %v1556
    %1585 = vmatprep.subr.bf16.mxu0 0
    %1586 = vmatpush1.bf16.msra.mxu0 %v1555
    %1587 = vmatprep.subr.bf16.mxu0 0
    %1588 = vmatpush2.bf16.msra.mxu0 0
    %1589 = vmatprep.subr.bf16.mxu0 0
    %1590 = vmatpush2.bf16.msra.mxu0 0
    %1591 = vmatprep.subr.bf16.mxu0 0
    %1592 = vmatpush2.bf16.msra.mxu0 0
    %1593 = vmatprep.subr.bf16.mxu0 0
    %1594 = vmatpush2.bf16.msra.mxu0 0
    %1595 = vmatprep.subr.bf16.mxu0 0
    %1596 = vmatpush2.bf16.msra.mxu0 0
    %1597 = vmatprep.subr.bf16.mxu0 0
    %1598 = vmatpush2.bf16.msra.mxu0 0
    %1599 = vmatprep.subr.bf16.mxu0 0
    %1600 = vmatpush2.bf16.msra.mxu0 0
    %1601 = vmatprep.subr.bf16.mxu0 0
    %1602 = vmatpush2.bf16.msra.mxu0 0
    %1603 = vmatprep.mubr.bf16.mxu0 0
    %1604 = vmatmul.mubr.bf16.gmra.mxu0 %v1521
    %v1605 = vpop.f32.mrf.mxu0
    %v1606 = vadd.f32 0.0, %v1605
    %v1607 = vpop.f32.mrf.mxu0
    %v1608 = vpop.f32.mrf.mxu0
    %v1609 = vpop.f32.mrf.mxu0
    %1610 = vdwg.mxu0
    %v1611 = vadd.f32 %v1503, %v1606
    %v1612 = vld [vmem:[#allocation9 + $0x13] ss:$0 sm:$0xff]
    %v1613 = vld [vmem:[#allocation9 + $0x14] ss:$0 sm:$0xff]
    %v1614 = vsel %vm518, %v1611, 0.0
    %1615 = vadd.xlane.f32.xlu0 %v1614
    %v1616 = vpop.xlane.xlu0 %1615
    %v1617 = vmul.f32 %v1616, %v531
    %v1618 = vsub.f32 %v1611, %v1617
    %v1619 = vmul.f32 %v1618, %v1618
    %v1620 = vsel %vm518, %v1619, 0.0
    %1621 = vadd.xlane.f32.xlu0 %v1620
    %v1622 = vpop.xlane.xlu0 %1621
    %v1623 = vmul.f32 %v1622, %v531
    %v1624 = vadd.f32 %v1623, 1e-05
    %v1625 = vrsqrt.pop %v1624
    %v1626 = vmul.f32 %v1618, %v1625
    %v1627 = vmul.f32 %v1626, %v1612
    %v1628 = vadd.f32 %v1627, %v1613
    %v1629 = vmul.f32 %v1628, 0.5
    %v1630 = vmul.f32 %v1628, 0.044715
    %v1631 = vmul.f32 %v1630, %v1628
    %v1632 = vmul.f32 %v1631, %v1628
    %v1633 = vadd.f32 %v1628, %v1632
    %v1634 = vmul.f32 %v1633, 0.7978846
    %v1635 = vtanh.pop %v1634
    %v1636 = vadd.f32 %v1635, 1.0
    %v1637 = vmul.f32 %v1629, %v1636
    %v1638 = vpack.c.bf16 %v1637, %v1637
    %v1639 = vld [vmem:[#allocation7 + $0x140] sm:$0x3]
    %v1640 = vld [vmem:[#allocation9 + $0x15] ss:$0 sm:$0xff]
    %1641 = vmatprep.subr.bf16.mxu0 0
    %1642 = vmatpush1.bf16.xpose.msra.mxu0 0
    %1643 = vmatprep.subr.bf16.mxu0 0
    %1644 = vmatpush1.bf16.xpose.msra.mxu0 0
    %1645 = vmatprep.subr.bf16.mxu0 0
    %1646 = vmatpush1.bf16.xpose.msra.mxu0 0
    %1647 = vmatprep.subr.bf16.mxu0 0
    %1648 = vmatpush1.bf16.xpose.msra.mxu0 0
    %1649 = vmatprep.subr.bf16.mxu0 0
    %1650 = vmatpush1.bf16.xpose.msra.mxu0 0
    %1651 = vmatprep.subr.bf16.mxu0 0
    %1652 = vmatpush1.bf16.xpose.msra.mxu0 0
    %1653 = vmatprep.subr.bf16.mxu0 0
    %1654 = vmatpush1.bf16.xpose.msra.mxu0 0
    %1655 = vmatprep.subr.bf16.mxu0 0
    %1656 = vmatpush1.bf16.xpose.msra.mxu0 %v1639
    %1657 = vmatprep.subr.bf16.mxu0 0
    %1658 = vmatpush2.bf16.xpose.msra.mxu0 0
    %1659 = vmatprep.subr.bf16.mxu0 0
    %1660 = vmatpush2.bf16.xpose.msra.mxu0 0
    %1661 = vmatprep.subr.bf16.mxu0 0
    %1662 = vmatpush2.bf16.xpose.msra.mxu0 0
    %1663 = vmatprep.subr.bf16.mxu0 0
    %1664 = vmatpush2.bf16.xpose.msra.mxu0 0
    %1665 = vmatprep.subr.bf16.mxu0 0
    %1666 = vmatpush2.bf16.xpose.msra.mxu0 0
    %1667 = vmatprep.subr.bf16.mxu0 0
    %1668 = vmatpush2.bf16.xpose.msra.mxu0 0
    %1669 = vmatprep.subr.bf16.mxu0 0
    %1670 = vmatpush2.bf16.xpose.msra.mxu0 0
    %1671 = vmatprep.subr.bf16.mxu0 0
    %1672 = vmatpush2.bf16.xpose.msra.mxu0 0
    %1673 = vmatprep.mubr.bf16.mxu0 0
    %1674 = vmatmul.mubr.bf16.gmra.mxu0 %v1638
    %v1675 = vpop.f32.mrf.mxu0
    %v1676 = vadd.f32 %v1640, %v1675
    %v1677 = vpop.f32.mrf.mxu0
    %v1678 = vpop.f32.mrf.mxu0
    %v1679 = vpop.f32.mrf.mxu0
    %1680 = vdwg.mxu0
    %vm1681 = vcmask 16384
    %v1682 = vsel %vm1681, %v1676, -inf
    %1683 = vmax.xlane.f32.xlu0 %v1682
    %v1684 = vpop.xlane.xlu0 %1683
    %v1685 = vsub.f32 %v1676, %v1684
    %v1686 = vmul.f32 %v1685, 1.442695
    %v1687 = vpow.pop %v1686
    %v1688 = vsel %vm1681, %v1687, 0.0
    %1689 = vadd.xlane.f32.xlu0 %v1688
    %v1690 = vpop.xlane.xlu0 %1689
    %v1691 = vrcp.pop %v1690
    %v1692 = vmul.f32 %v1687, %v1691
    %v1693 = vmul.f32 %v1692, 0.9
    %v1694 = vadd.f32 %v1693, 0.033333335
    %v1695 = vpack.c.bf16 %v1694, %v1694
    %vm1696 = vcmask 23552
    %v1698 = vsel %vm1696, %v1695, 0
    %v1700 = vsel %vm518, 4294967295, 65535
    %v1701 = vsel %vm520, %v1700, 0
    %v1702 = vand.u32 %v88, %v1701
    %1704 = vmatprep.subr.bf16.mxu0 0
    %1705 = vmatpush1.bf16.msra.mxu0 0
    %1706 = vmatprep.subr.bf16.mxu0 0
    %1707 = vmatpush1.bf16.msra.mxu0 0
    %1708 = vmatprep.subr.bf16.mxu0 0
    %1709 = vmatpush1.bf16.msra.mxu0 0
    %1710 = vmatprep.subr.bf16.mxu0 0
    %1711 = vmatpush1.bf16.msra.mxu0 0
    %1712 = vmatprep.subr.bf16.mxu0 0
    %1713 = vmatpush1.bf16.msra.mxu0 0
    %1714 = vmatprep.subr.bf16.mxu0 0
    %1715 = vmatpush1.bf16.msra.mxu0 0
    %1716 = vmatprep.subr.bf16.mxu0 0
    %1717 = vmatpush1.bf16.msra.mxu0 0
    %1718 = vmatprep.subr.bf16.mxu0 0
    %1719 = vmatpush1.bf16.msra.mxu0 %v1702
    %1720 = vmatprep.subr.bf16.mxu0 0
    %1721 = vmatpush2.bf16.msra.mxu0 0
    %1722 = vmatprep.subr.bf16.mxu0 0
    %1723 = vmatpush2.bf16.msra.mxu0 0
    %1724 = vmatprep.subr.bf16.mxu0 0
    %1725 = vmatpush2.bf16.msra.mxu0 0
    %1726 = vmatprep.subr.bf16.mxu0 0
    %1727 = vmatpush2.bf16.msra.mxu0 0
    %1728 = vmatprep.subr.bf16.mxu0 0
    %1729 = vmatpush2.bf16.msra.mxu0 0
    %1730 = vmatprep.subr.bf16.mxu0 0
    %1731 = vmatpush2.bf16.msra.mxu0 0
    %1732 = vmatprep.subr.bf16.mxu0 0
    %1733 = vmatpush2.bf16.msra.mxu0 0
    %1734 = vmatprep.subr.bf16.mxu0 0
    %1735 = vmatpush2.bf16.msra.mxu0 0
    %1736 = vmatprep.mubr.bf16.mxu0 0
    %1737 = vmatmul.mubr.bf16.gmra.mxu0 %v1698
    %v1738 = vpop.f32.mrf.mxu0
    %v1739 = vadd.f32 0.0, %v1738
    %v1740 = vpop.f32.mrf.mxu0
    %v1741 = vpop.f32.mrf.mxu0
    %v1742 = vpop.f32.mrf.mxu0
    %1743 = vdwg.mxu0
    %v1744 = vadd.f32 %v1284, %v1739
    %1745 = vst [vmem:[%s5] sm:$0x1] %v1744
    %1746 = vst [vmem:[%s5 + $0x1] sm:$0x1] 0.0
    %1747 = vst.msk [vmem:[%s5 + $0x1] sm:$0x1] %vm1681, %v1694
    // Predicated region
    $region42: #{hierarchical_aggregation.1} parent=1 // pred_check
      _
    $region43: #{hierarchical_aggregation.1} parent=1 // pred_check_branch
      %1749 = sbr.rel (0) target = $region45
    $region44: #{hierarchical_aggregation.1} parent=1 // pred_region
      _
    $region45: #{hierarchical_aggregation.1} parent=1 // pred_fallthru
      _
    // Predicated region
    $region46: #{hierarchical_aggregation.1} parent=1 // pred_check
      _
    $region47: #{hierarchical_aggregation.1} parent=1 // pred_check_branch
      %1751 = sbr.rel (0) target = $region49
    $region48: #{hierarchical_aggregation.1} parent=1 // pred_region
      _
    $region49: #{hierarchical_aggregation.1} parent=1 // pred_fallthru
      _
    %1752 = vsyncpa [#allocation3], 1
    %1753 = vsyncpa [#allocation5], 1
    %1754 = vsyncpa [#allocation8], 1

</llo_original>
